<compile_context>
chip_gen: v5e
topology: v5e:2x2
jax: 0.10.0
libtpu: 0.0.40
codegen_flags: <defaults>
</compile_context>

<pallas_src>
import functools
import math

import jax
import jax.numpy as jnp
from jax.experimental import pallas as pl
from jax.experimental.pallas import tpu as pltpu


def _round_up(n: int, m: int) -> int:
    return ((n + m - 1) // m) * m


def _pad2(a, rows, cols):
    return jnp.pad(a, ((0, rows - a.shape[0]), (0, cols - a.shape[1])))


def _linear(h_bf16, w_ref, b_ref):
    # bf16 operands on the MXU with f32 accumulation; bias add stays f32 (VPU).
    return (
        jnp.dot(h_bf16, w_ref[...], preferred_element_type=jnp.float32)
        + b_ref[...]
    )


def _ln_relu(z, g_ref, beta_ref, hidden_size, pad_count, eps):
    # LayerNorm over the true hidden dim on a lane-padded tile.
    # Padded lanes of z are exactly 0, so sum(z) over all lanes already equals
    # the sum over valid lanes. Padded lanes of c = z - mean equal -mean
    # exactly, so instead of an iota/where mask we subtract their contribution
    # to sum(c*c) in closed form.
    inv_h = 1.0 / hidden_size
    mean = jnp.sum(z, axis=-1, keepdims=True) * inv_h
    c = z - mean
    ss = jnp.sum(c * c, axis=-1, keepdims=True)
    if pad_count:  # Python int -> resolved at trace time; 0 when hid % 128 == 0
        ss = ss - pad_count * (mean * mean)
    var = ss * inv_h
    normed = c * jax.lax.rsqrt(var + eps)
    # gamma/beta are zero in the padded lanes -> padded lanes return to 0.
    out = jnp.maximum(normed * g_ref[...] + beta_ref[...], 0.0)
    return out.astype(jnp.bfloat16)  # bf16 carry into the next MXU pass


def mlp_kernel(x_ref,
               w1_ref, b1_ref,
               w2_ref, b2_ref, g2_ref, be2_ref,
               w3_ref, b3_ref, g3_ref, be3_ref,
               w4_ref, b4_ref, g4_ref, be4_ref,
               w5_ref, b5_ref,
               o_ref, *, hidden_size, pad_count, eps, logit_threshold):
    bf16 = jnp.bfloat16
    x = x_ref[...].astype(bf16)
    # fc1: Linear + ReLU (carried in bf16)
    h = jnp.maximum(_linear(x, w1_ref, b1_ref), 0.0).astype(bf16)
    # fc2..fc4: Linear + LayerNorm + ReLU
    h = _ln_relu(_linear(h, w2_ref, b2_ref), g2_ref, be2_ref,
                 hidden_size, pad_count, eps)
    h = _ln_relu(_linear(h, w3_ref, b3_ref), g3_ref, be3_ref,
                 hidden_size, pad_count, eps)
    h = _ln_relu(_linear(h, w4_ref, b4_ref), g4_ref, be4_ref,
                 hidden_size, pad_count, eps)
    # fc5: Linear + Sigmoid, then eval thresholding:
    #   sigmoid(z) > t  <=>  z > logit(t)   -> single VPU compare, no EUP.
    z = _linear(h, w5_ref, b5_ref)
    o_ref[...] = (z > logit_threshold).astype(o_ref.dtype)


def pad_params(params, input_size, hidden_size, output_size):
    """Pad/cast the raw f32 params ONCE into lane-dense kernel form.

    Matmul weights -> bf16, zero-padded to multiples of 128 on both dims;
    biases / LayerNorm gamma & beta stay f32, zero-padded along lanes.
    Call this once and reuse the result across invocations.
    """
    (w1, b1, w2, b2, g2, be2, w3, b3, g3, be3,
     w4, b4, g4, be4, w5, b5) = params
    in_p = _round_up(input_size, 128)
    hid_p = _round_up(hidden_size, 128)
    out_p = _round_up(output_size, 128)
    bf16 = jnp.bfloat16
    weights = (
        _pad2(w1, in_p, hid_p).astype(bf16), _pad2(b1, 1, hid_p),
        _pad2(w2, hid_p, hid_p).astype(bf16), _pad2(b2, 1, hid_p),
        _pad2(g2, 1, hid_p), _pad2(be2, 1, hid_p),
        _pad2(w3, hid_p, hid_p).astype(bf16), _pad2(b3, 1, hid_p),
        _pad2(g3, 1, hid_p), _pad2(be3, 1, hid_p),
        _pad2(w4, hid_p, hid_p).astype(bf16), _pad2(b4, 1, hid_p),
        _pad2(g4, 1, hid_p), _pad2(be4, 1, hid_p),
        _pad2(w5, hid_p, out_p).astype(bf16), _pad2(b5, 1, out_p),
    )
    return {"weights": weights,
            "dims": (input_size, hidden_size, output_size),
            "padded": (in_p, hid_p, out_p)}


def simple_deeper_mlp(x, prepared, *, hyphen_threshold=0.5, eps=1e-5,
                      block_m=512):
    """x: [B, input_size] f32 -> [B, output_size] f32 (0.0 / 1.0)."""
    assert 0.0 < hyphen_threshold < 1.0, "hyphen_threshold must be in (0, 1)"
    weights = prepared["weights"]
    input_size, hidden_size, output_size = prepared["dims"]
    in_p, hid_p, out_p = prepared["padded"]
    B, xin = x.shape
    assert xin == input_size

    # Batch tile: multiple of 8; >=2 grid steps once B > 8 so a "parallel"
    # grid axis can actually feed both TensorCores on v7x.
    if B <= 8:
        tm = _round_up(max(B, 1), 8)
    else:
        tm = max(8, min(block_m, _round_up(pl.cdiv(B, 2), 8)))
    b_p = _round_up(B, tm)

    x_p = _pad2(x, b_p, in_p)

    logit_t = float(math.log(hyphen_threshold / (1.0 - hyphen_threshold)))
    kernel = functools.partial(
        mlp_kernel, hidden_size=hidden_size, pad_count=hid_p - hidden_size,
        eps=eps, logit_threshold=logit_t)

    weight_bytes = sum(int(w.size) * w.dtype.itemsize for w in weights)
    cost = pl.CostEstimate(
        flops=2 * B * (in_p * hid_p + 3 * hid_p * hid_p + hid_p * out_p),
        transcendentals=3 * B,  # one rsqrt per row per LayerNorm
        bytes_accessed=weight_bytes + b_p * in_p * 4 + b_p * out_p * 4)

    try:
        vmem_cap = int(pltpu.get_tpu_info().vmem_capacity_bytes)
    except Exception:  # pragma: no cover - be conservative if query fails
        vmem_cap = 64 * 1024 * 1024

    def _run(single_buffer):
        resident_specs = []
        for w in weights:
            if single_buffer:
                # Constant index_map + single buffer: weights fetched once,
                # stay VMEM-resident, no double-buffer copy.
                spec = pl.BlockSpec(w.shape, lambda i: (0, 0),
                                    pipeline_mode=pl.Buffered(buffer_count=1))
            else:
                spec = pl.BlockSpec(w.shape, lambda i: (0, 0))
            resident_specs.append(spec)
        nbuf = 1 if single_buffer else 2
        # resident weights (x nbuf) + double-buffered x/o tiles + activation
        # temporaries, ~30% headroom, clamped to physical VMEM.
        need = (nbuf * weight_bytes
                + 2 * (tm * in_p * 4 + tm * out_p * 4)
                + 6 * tm * hid_p * 4)
        vmem_budget = min(max(int(1.3 * need), 16 * 1024 * 1024),
                          int(0.9 * vmem_cap))
        return pl.pallas_call(
            kernel,
            out_shape=jax.ShapeDtypeStruct((b_p, out_p), jnp.float32),
            grid=(b_p // tm,),
            in_specs=[pl.BlockSpec((tm, in_p), lambda i: (i, 0))]
                     + resident_specs,
            out_specs=pl.BlockSpec((tm, out_p), lambda i: (i, 0)),
            compiler_params=pltpu.CompilerParams(
                dimension_semantics=("parallel",),
                vmem_limit_bytes=vmem_budget),
            cost_estimate=cost,
        )(x_p, *weights)

    try:
        out_full = _run(True)
    except Exception:
        # Fallback for jax/Mosaic versions without single-buffer pipeline_mode.
        out_full = _run(False)

    return out_full[:B, :output_size]


def init_params(key, input_size, hidden_size, output_size):
    """Deterministic synthetic init following nn.Linear / nn.LayerNorm shapes.

    Linear weights are stored as [in, out] (transpose of PyTorch's [out, in])
    so the kernel computes x @ W + b directly on the MXU.
    """
    ks = jax.random.split(key, 8)

    def linear(k, fan_in, fan_out):
        kw, kb = jax.random.split(k)
        s = 1.0 / math.sqrt(fan_in)
        w = jax.random.uniform(kw, (fan_in, fan_out), jnp.float32, -s, s)
        b = jax.random.uniform(kb, (1, fan_out), jnp.float32, -s, s)
        return w, b

    def layernorm(k, dim):
        kg, kb = jax.random.split(k)
        g = jax.random.uniform(kg, (1, dim), jnp.float32, 0.9, 1.1)
        be = jax.random.uniform(kb, (1, dim), jnp.float32, -0.1, 0.1)
        return g, be

    w1, b1 = linear(ks[0], input_size, hidden_size)
    w2, b2 = linear(ks[1], hidden_size, hidden_size)
    w3, b3 = linear(ks[2], hidden_size, hidden_size)
    w4, b4 = linear(ks[3], hidden_size, hidden_size)
    w5, b5 = linear(ks[4], hidden_size, output_size)
    g2, be2 = layernorm(ks[5], hidden_size)
    g3, be3 = layernorm(ks[6], hidden_size)
    g4, be4 = layernorm(ks[7], hidden_size)
    return (w1, b1, w2, b2, g2, be2, w3, b3, g3, be3,
            w4, b4, g4, be4, w5, b5)


def ref_forward(x, params, hyphen_threshold=0.5, eps=1e-5):
    """Plain-JAX reference with the same bf16-matmul / f32-LN recipe."""
    (w1, b1, w2, b2, g2, be2, w3, b3, g3, be3,
     w4, b4, g4, be4, w5, b5) = params
    bf16 = jnp.bfloat16

    def lin(h, w, b):
        return jnp.dot(h, w.astype(bf16),
                       preferred_element_type=jnp.float32) + b

    def ln(z, g, be):
        mu = jnp.mean(z, axis=-1, keepdims=True)
        var = jnp.mean(jnp.square(z - mu), axis=-1, keepdims=True)
        return (z - mu) * jax.lax.rsqrt(var + eps) * g + be

    h = jnp.maximum(lin(x.astype(bf16), w1, b1), 0.0).astype(bf16)
    h = jnp.maximum(ln(lin(h, w2, b2), g2, be2), 0.0).astype(bf16)
    h = jnp.maximum(ln(lin(h, w3, b3), g3, be3), 0.0).astype(bf16)
    h = jnp.maximum(ln(lin(h, w4, b4), g4, be4), 0.0).astype(bf16)
    z = lin(h, w5, b5)
    logit_t = math.log(hyphen_threshold / (1.0 - hyphen_threshold))
    return (z > logit_t).astype(jnp.float32)  # == sigmoid(z) > threshold


if __name__ == "__main__":
    key = jax.random.PRNGKey(0)
    k_x, k_p = jax.random.split(key)

    batch, input_size, hidden_size, output_size = 8, 16, 32, 8
    x = jax.random.normal(k_x, (batch, input_size), dtype=jnp.float32)
    params = init_params(k_p, input_size, hidden_size, output_size)

    # Pad/cast the parameters once; reuse across calls.
    prepared = pad_params(params, input_size, hidden_size, output_size)

    out = simple_deeper_mlp(x, prepared)
    out = jax.block_until_ready(out)

    ref = ref_forward(x, params)
    assert out.shape == (batch, output_size)
    assert bool(jnp.array_equal(out, ref)), "mismatch vs reference"

    print("KERNEL_OK")
</pallas_src>

<mosaic_0001>
module attributes {stable_mosaic.version = 11 : i64} {
  func.func @mlp_kernel(%arg0: i32, %arg1: memref<8x128xf32, #tpu.memory_space<vmem>>, %arg2: memref<128x128xbf16, #tpu.memory_space<vmem>>, %arg3: memref<1x128xf32, #tpu.memory_space<vmem>>, %arg4: memref<128x128xbf16, #tpu.memory_space<vmem>>, %arg5: memref<1x128xf32, #tpu.memory_space<vmem>>, %arg6: memref<1x128xf32, #tpu.memory_space<vmem>>, %arg7: memref<1x128xf32, #tpu.memory_space<vmem>>, %arg8: memref<128x128xbf16, #tpu.memory_space<vmem>>, %arg9: memref<1x128xf32, #tpu.memory_space<vmem>>, %arg10: memref<1x128xf32, #tpu.memory_space<vmem>>, %arg11: memref<1x128xf32, #tpu.memory_space<vmem>>, %arg12: memref<128x128xbf16, #tpu.memory_space<vmem>>, %arg13: memref<1x128xf32, #tpu.memory_space<vmem>>, %arg14: memref<1x128xf32, #tpu.memory_space<vmem>>, %arg15: memref<1x128xf32, #tpu.memory_space<vmem>>, %arg16: memref<128x128xbf16, #tpu.memory_space<vmem>>, %arg17: memref<1x128xf32, #tpu.memory_space<vmem>>, %arg18: memref<8x128xf32, #tpu.memory_space<vmem>>) attributes {dimension_semantics = [#tpu.dimension_semantics<parallel>], iteration_bounds = array<i64: 1>, scalar_prefetch = 0 : i64, scratch_operands = 0 : i64, tpu.core_type = #tpu.core_type<tc>, window_params = [{transform_indices = @transform_0, window_bounds = array<i64: 8, 128>}, {pipeline_mode = #tpu.pipeline_mode<synchronous>, transform_indices = @transform_1, window_bounds = array<i64: 128, 128>}, {pipeline_mode = #tpu.pipeline_mode<synchronous>, transform_indices = @transform_2, window_bounds = array<i64: 1, 128>}, {pipeline_mode = #tpu.pipeline_mode<synchronous>, transform_indices = @transform_3, window_bounds = array<i64: 128, 128>}, {pipeline_mode = #tpu.pipeline_mode<synchronous>, transform_indices = @transform_4, window_bounds = array<i64: 1, 128>}, {pipeline_mode = #tpu.pipeline_mode<synchronous>, transform_indices = @transform_5, window_bounds = array<i64: 1, 128>}, {pipeline_mode = #tpu.pipeline_mode<synchronous>, transform_indices = @transform_6, window_bounds = array<i64: 1, 128>}, {pipeline_mode = #tpu.pipeline_mode<synchronous>, transform_indices = @transform_7, window_bounds = array<i64: 128, 128>}, {pipeline_mode = #tpu.pipeline_mode<synchronous>, transform_indices = @transform_8, window_bounds = array<i64: 1, 128>}, {pipeline_mode = #tpu.pipeline_mode<synchronous>, transform_indices = @transform_9, window_bounds = array<i64: 1, 128>}, {pipeline_mode = #tpu.pipeline_mode<synchronous>, transform_indices = @transform_10, window_bounds = array<i64: 1, 128>}, {pipeline_mode = #tpu.pipeline_mode<synchronous>, transform_indices = @transform_11, window_bounds = array<i64: 128, 128>}, {pipeline_mode = #tpu.pipeline_mode<synchronous>, transform_indices = @transform_12, window_bounds = array<i64: 1, 128>}, {pipeline_mode = #tpu.pipeline_mode<synchronous>, transform_indices = @transform_13, window_bounds = array<i64: 1, 128>}, {pipeline_mode = #tpu.pipeline_mode<synchronous>, transform_indices = @transform_14, window_bounds = array<i64: 1, 128>}, {pipeline_mode = #tpu.pipeline_mode<synchronous>, transform_indices = @transform_15, window_bounds = array<i64: 128, 128>}, {pipeline_mode = #tpu.pipeline_mode<synchronous>, transform_indices = @transform_16, window_bounds = array<i64: 1, 128>}, {transform_indices = @transform_17, window_bounds = array<i64: 8, 128>}]} {
    %c0 = arith.constant 0 : index
    %c0_0 = arith.constant 0 : index
    %0 = vector.load %arg1[%c0, %c0_0] : memref<8x128xf32, #tpu.memory_space<vmem>>, vector<8x128xf32>
    %1 = arith.truncf %0 : vector<8x128xf32> to vector<8x128xbf16>
    %c0_1 = arith.constant 0 : index
    %c0_2 = arith.constant 0 : index
    %2 = vector.load %arg2[%c0_1, %c0_2] : memref<128x128xbf16, #tpu.memory_space<vmem>>, vector<128x128xbf16>
    %cst = arith.constant dense<0.000000e+00> : vector<8x128xf32>
    %3 = tpu.matmul %1, %2, %cst {dimension_numbers = #tpu.dot_dimension_numbers<[1], [0], [0], [1], [0, 0, 1, 1], [], []>} : vector<8x128xbf16>, vector<128x128xbf16>, vector<8x128xf32> -> vector<8x128xf32>
    %c0_3 = arith.constant 0 : index
    %c0_4 = arith.constant 0 : index
    %4 = vector.load %arg3[%c0_3, %c0_4] : memref<1x128xf32, #tpu.memory_space<vmem>>, vector<1x128xf32>
    %5 = vector.broadcast %4 : vector<1x128xf32> to vector<8x128xf32>
    %6 = arith.addf %3, %5 : vector<8x128xf32>
    %cst_5 = arith.constant 0.000000e+00 : f32
    %7 = vector.broadcast %cst_5 : f32 to vector<8x128xf32>
    %8 = arith.maximumf %6, %7 : vector<8x128xf32>
    %9 = arith.truncf %8 : vector<8x128xf32> to vector<8x128xbf16>
    %c0_6 = arith.constant 0 : index
    %c0_7 = arith.constant 0 : index
    %10 = vector.load %arg4[%c0_6, %c0_7] : memref<128x128xbf16, #tpu.memory_space<vmem>>, vector<128x128xbf16>
    %cst_8 = arith.constant dense<0.000000e+00> : vector<8x128xf32>
    %11 = tpu.matmul %9, %10, %cst_8 {dimension_numbers = #tpu.dot_dimension_numbers<[1], [0], [0], [1], [0, 0, 1, 1], [], []>} : vector<8x128xbf16>, vector<128x128xbf16>, vector<8x128xf32> -> vector<8x128xf32>
    %c0_9 = arith.constant 0 : index
    %c0_10 = arith.constant 0 : index
    %12 = vector.load %arg5[%c0_9, %c0_10] : memref<1x128xf32, #tpu.memory_space<vmem>>, vector<1x128xf32>
    %13 = vector.broadcast %12 : vector<1x128xf32> to vector<8x128xf32>
    %14 = arith.addf %11, %13 : vector<8x128xf32>
    %cst_11 = arith.constant dense<0.000000e+00> : vector<8xf32>
    %15 = vector.multi_reduction <add>, %14, %cst_11 [1] : vector<8x128xf32> to vector<8xf32>
    %16 = vector.shape_cast %15 : vector<8xf32> to vector<8x1xf32>
    %cst_12 = arith.constant 3.125000e-02 : f32
    %17 = vector.broadcast %cst_12 : f32 to vector<8x1xf32>
    %18 = arith.mulf %16, %17 : vector<8x1xf32>
    %19 = vector.broadcast %18 : vector<8x1xf32> to vector<8x128xf32>
    %20 = arith.subf %14, %19 : vector<8x128xf32>
    %21 = arith.mulf %20, %20 : vector<8x128xf32>
    %cst_13 = arith.constant dense<0.000000e+00> : vector<8xf32>
    %22 = vector.multi_reduction <add>, %21, %cst_13 [1] : vector<8x128xf32> to vector<8xf32>
    %23 = vector.shape_cast %22 : vector<8xf32> to vector<8x1xf32>
    %24 = arith.mulf %18, %18 : vector<8x1xf32>
    %cst_14 = arith.constant 9.600000e+01 : f32
    %25 = vector.broadcast %cst_14 : f32 to vector<8x1xf32>
    %26 = arith.mulf %25, %24 : vector<8x1xf32>
    %27 = arith.subf %23, %26 : vector<8x1xf32>
    %cst_15 = arith.constant 3.125000e-02 : f32
    %28 = vector.broadcast %cst_15 : f32 to vector<8x1xf32>
    %29 = arith.mulf %27, %28 : vector<8x1xf32>
    %cst_16 = arith.constant 9.99999974E-6 : f32
    %30 = vector.broadcast %cst_16 : f32 to vector<8x1xf32>
    %31 = arith.addf %29, %30 : vector<8x1xf32>
    %32 = math.rsqrt %31 : vector<8x1xf32>
    %33 = vector.broadcast %32 : vector<8x1xf32> to vector<8x128xf32>
    %34 = arith.mulf %20, %33 : vector<8x128xf32>
    %c0_17 = arith.constant 0 : index
    %c0_18 = arith.constant 0 : index
    %35 = vector.load %arg6[%c0_17, %c0_18] : memref<1x128xf32, #tpu.memory_space<vmem>>, vector<1x128xf32>
    %36 = vector.broadcast %35 : vector<1x128xf32> to vector<8x128xf32>
    %37 = arith.mulf %34, %36 : vector<8x128xf32>
    %c0_19 = arith.constant 0 : index
    %c0_20 = arith.constant 0 : index
    %38 = vector.load %arg7[%c0_19, %c0_20] : memref<1x128xf32, #tpu.memory_space<vmem>>, vector<1x128xf32>
    %39 = vector.broadcast %38 : vector<1x128xf32> to vector<8x128xf32>
    %40 = arith.addf %37, %39 : vector<8x128xf32>
    %cst_21 = arith.constant 0.000000e+00 : f32
    %41 = vector.broadcast %cst_21 : f32 to vector<8x128xf32>
    %42 = arith.maximumf %40, %41 : vector<8x128xf32>
    %43 = arith.truncf %42 : vector<8x128xf32> to vector<8x128xbf16>
    %c0_22 = arith.constant 0 : index
    %c0_23 = arith.constant 0 : index
    %44 = vector.load %arg8[%c0_22, %c0_23] : memref<128x128xbf16, #tpu.memory_space<vmem>>, vector<128x128xbf16>
    %cst_24 = arith.constant dense<0.000000e+00> : vector<8x128xf32>
    %45 = tpu.matmul %43, %44, %cst_24 {dimension_numbers = #tpu.dot_dimension_numbers<[1], [0], [0], [1], [0, 0, 1, 1], [], []>} : vector<8x128xbf16>, vector<128x128xbf16>, vector<8x128xf32> -> vector<8x128xf32>
    %c0_25 = arith.constant 0 : index
    %c0_26 = arith.constant 0 : index
    %46 = vector.load %arg9[%c0_25, %c0_26] : memref<1x128xf32, #tpu.memory_space<vmem>>, vector<1x128xf32>
    %47 = vector.broadcast %46 : vector<1x128xf32> to vector<8x128xf32>
    %48 = arith.addf %45, %47 : vector<8x128xf32>
    %cst_27 = arith.constant dense<0.000000e+00> : vector<8xf32>
    %49 = vector.multi_reduction <add>, %48, %cst_27 [1] : vector<8x128xf32> to vector<8xf32>
    %50 = vector.shape_cast %49 : vector<8xf32> to vector<8x1xf32>
    %cst_28 = arith.constant 3.125000e-02 : f32
    %51 = vector.broadcast %cst_28 : f32 to vector<8x1xf32>
    %52 = arith.mulf %50, %51 : vector<8x1xf32>
    %53 = vector.broadcast %52 : vector<8x1xf32> to vector<8x128xf32>
    %54 = arith.subf %48, %53 : vector<8x128xf32>
    %55 = arith.mulf %54, %54 : vector<8x128xf32>
    %cst_29 = arith.constant dense<0.000000e+00> : vector<8xf32>
    %56 = vector.multi_reduction <add>, %55, %cst_29 [1] : vector<8x128xf32> to vector<8xf32>
    %57 = vector.shape_cast %56 : vector<8xf32> to vector<8x1xf32>
    %58 = arith.mulf %52, %52 : vector<8x1xf32>
    %cst_30 = arith.constant 9.600000e+01 : f32
    %59 = vector.broadcast %cst_30 : f32 to vector<8x1xf32>
    %60 = arith.mulf %59, %58 : vector<8x1xf32>
    %61 = arith.subf %57, %60 : vector<8x1xf32>
    %cst_31 = arith.constant 3.125000e-02 : f32
    %62 = vector.broadcast %cst_31 : f32 to vector<8x1xf32>
    %63 = arith.mulf %61, %62 : vector<8x1xf32>
    %cst_32 = arith.constant 9.99999974E-6 : f32
    %64 = vector.broadcast %cst_32 : f32 to vector<8x1xf32>
    %65 = arith.addf %63, %64 : vector<8x1xf32>
    %66 = math.rsqrt %65 : vector<8x1xf32>
    %67 = vector.broadcast %66 : vector<8x1xf32> to vector<8x128xf32>
    %68 = arith.mulf %54, %67 : vector<8x128xf32>
    %c0_33 = arith.constant 0 : index
    %c0_34 = arith.constant 0 : index
    %69 = vector.load %arg10[%c0_33, %c0_34] : memref<1x128xf32, #tpu.memory_space<vmem>>, vector<1x128xf32>
    %70 = vector.broadcast %69 : vector<1x128xf32> to vector<8x128xf32>
    %71 = arith.mulf %68, %70 : vector<8x128xf32>
    %c0_35 = arith.constant 0 : index
    %c0_36 = arith.constant 0 : index
    %72 = vector.load %arg11[%c0_35, %c0_36] : memref<1x128xf32, #tpu.memory_space<vmem>>, vector<1x128xf32>
    %73 = vector.broadcast %72 : vector<1x128xf32> to vector<8x128xf32>
    %74 = arith.addf %71, %73 : vector<8x128xf32>
    %cst_37 = arith.constant 0.000000e+00 : f32
    %75 = vector.broadcast %cst_37 : f32 to vector<8x128xf32>
    %76 = arith.maximumf %74, %75 : vector<8x128xf32>
    %77 = arith.truncf %76 : vector<8x128xf32> to vector<8x128xbf16>
    %c0_38 = arith.constant 0 : index
    %c0_39 = arith.constant 0 : index
    %78 = vector.load %arg12[%c0_38, %c0_39] : memref<128x128xbf16, #tpu.memory_space<vmem>>, vector<128x128xbf16>
    %cst_40 = arith.constant dense<0.000000e+00> : vector<8x128xf32>
    %79 = tpu.matmul %77, %78, %cst_40 {dimension_numbers = #tpu.dot_dimension_numbers<[1], [0], [0], [1], [0, 0, 1, 1], [], []>} : vector<8x128xbf16>, vector<128x128xbf16>, vector<8x128xf32> -> vector<8x128xf32>
    %c0_41 = arith.constant 0 : index
    %c0_42 = arith.constant 0 : index
    %80 = vector.load %arg13[%c0_41, %c0_42] : memref<1x128xf32, #tpu.memory_space<vmem>>, vector<1x128xf32>
    %81 = vector.broadcast %80 : vector<1x128xf32> to vector<8x128xf32>
    %82 = arith.addf %79, %81 : vector<8x128xf32>
    %cst_43 = arith.constant dense<0.000000e+00> : vector<8xf32>
    %83 = vector.multi_reduction <add>, %82, %cst_43 [1] : vector<8x128xf32> to vector<8xf32>
    %84 = vector.shape_cast %83 : vector<8xf32> to vector<8x1xf32>
    %cst_44 = arith.constant 3.125000e-02 : f32
    %85 = vector.broadcast %cst_44 : f32 to vector<8x1xf32>
    %86 = arith.mulf %84, %85 : vector<8x1xf32>
    %87 = vector.broadcast %86 : vector<8x1xf32> to vector<8x128xf32>
    %88 = arith.subf %82, %87 : vector<8x128xf32>
    %89 = arith.mulf %88, %88 : vector<8x128xf32>
    %cst_45 = arith.constant dense<0.000000e+00> : vector<8xf32>
    %90 = vector.multi_reduction <add>, %89, %cst_45 [1] : vector<8x128xf32> to vector<8xf32>
    %91 = vector.shape_cast %90 : vector<8xf32> to vector<8x1xf32>
    %92 = arith.mulf %86, %86 : vector<8x1xf32>
    %cst_46 = arith.constant 9.600000e+01 : f32
    %93 = vector.broadcast %cst_46 : f32 to vector<8x1xf32>
    %94 = arith.mulf %93, %92 : vector<8x1xf32>
    %95 = arith.subf %91, %94 : vector<8x1xf32>
    %cst_47 = arith.constant 3.125000e-02 : f32
    %96 = vector.broadcast %cst_47 : f32 to vector<8x1xf32>
    %97 = arith.mulf %95, %96 : vector<8x1xf32>
    %cst_48 = arith.constant 9.99999974E-6 : f32
    %98 = vector.broadcast %cst_48 : f32 to vector<8x1xf32>
    %99 = arith.addf %97, %98 : vector<8x1xf32>
    %100 = math.rsqrt %99 : vector<8x1xf32>
    %101 = vector.broadcast %100 : vector<8x1xf32> to vector<8x128xf32>
    %102 = arith.mulf %88, %101 : vector<8x128xf32>
    %c0_49 = arith.constant 0 : index
    %c0_50 = arith.constant 0 : index
    %103 = vector.load %arg14[%c0_49, %c0_50] : memref<1x128xf32, #tpu.memory_space<vmem>>, vector<1x128xf32>
    %104 = vector.broadcast %103 : vector<1x128xf32> to vector<8x128xf32>
    %105 = arith.mulf %102, %104 : vector<8x128xf32>
    %c0_51 = arith.constant 0 : index
    %c0_52 = arith.constant 0 : index
    %106 = vector.load %arg15[%c0_51, %c0_52] : memref<1x128xf32, #tpu.memory_space<vmem>>, vector<1x128xf32>
    %107 = vector.broadcast %106 : vector<1x128xf32> to vector<8x128xf32>
    %108 = arith.addf %105, %107 : vector<8x128xf32>
    %cst_53 = arith.constant 0.000000e+00 : f32
    %109 = vector.broadcast %cst_53 : f32 to vector<8x128xf32>
    %110 = arith.maximumf %108, %109 : vector<8x128xf32>
    %111 = arith.truncf %110 : vector<8x128xf32> to vector<8x128xbf16>
    %c0_54 = arith.constant 0 : index
    %c0_55 = arith.constant 0 : index
    %112 = vector.load %arg16[%c0_54, %c0_55] : memref<128x128xbf16, #tpu.memory_space<vmem>>, vector<128x128xbf16>
    %cst_56 = arith.constant dense<0.000000e+00> : vector<8x128xf32>
    %113 = tpu.matmul %111, %112, %cst_56 {dimension_numbers = #tpu.dot_dimension_numbers<[1], [0], [0], [1], [0, 0, 1, 1], [], []>} : vector<8x128xbf16>, vector<128x128xbf16>, vector<8x128xf32> -> vector<8x128xf32>
    %c0_57 = arith.constant 0 : index
    %c0_58 = arith.constant 0 : index
    %114 = vector.load %arg17[%c0_57, %c0_58] : memref<1x128xf32, #tpu.memory_space<vmem>>, vector<1x128xf32>
    %115 = vector.broadcast %114 : vector<1x128xf32> to vector<8x128xf32>
    %116 = arith.addf %113, %115 : vector<8x128xf32>
    %cst_59 = arith.constant 0.000000e+00 : f32
    %117 = vector.broadcast %cst_59 : f32 to vector<8x128xf32>
    %118 = arith.cmpf ogt, %116, %117 : vector<8x128xf32>
    %119 = arith.extui %118 : vector<8x128xi1> to vector<8x128xi32>
    %120 = arith.sitofp %119 : vector<8x128xi32> to vector<8x128xf32>
    %c0_60 = arith.constant 0 : index
    %c0_61 = arith.constant 0 : index
    %121 = vector.load %arg18[%c0_60, %c0_61] : memref<8x128xf32, #tpu.memory_space<vmem>>, vector<8x128xf32>
    tpu.vector_store %arg18[%c0_60, %c0_61], %120 {strides = array<i32>} : memref<8x128xf32, #tpu.memory_space<vmem>>, vector<8x128xf32>,
    return
  }
  func.func @transform_0(%arg0: i32) -> (i32, i32) {
    %c0_i32 = arith.constant 0 : i32
    %c0_i32_0 = arith.constant 0 : i32
    return %arg0, %c0_i32 : i32, i32
  }
  func.func @transform_1(%arg0: i32) -> (i32, i32) {
    %c0_i32 = arith.constant 0 : i32
    %c0_i32_0 = arith.constant 0 : i32
    %c0_i32_1 = arith.constant 0 : i32
    return %c0_i32, %c0_i32_0 : i32, i32
  }
  func.func @transform_2(%arg0: i32) -> (i32, i32) {
    %c0_i32 = arith.constant 0 : i32
    %c0_i32_0 = arith.constant 0 : i32
    %c0_i32_1 = arith.constant 0 : i32
    return %c0_i32, %c0_i32_0 : i32, i32
  }
  func.func @transform_3(%arg0: i32) -> (i32, i32) {
    %c0_i32 = arith.constant 0 : i32
    %c0_i32_0 = arith.constant 0 : i32
    %c0_i32_1 = arith.constant 0 : i32
    return %c0_i32, %c0_i32_0 : i32, i32
  }
  func.func @transform_4(%arg0: i32) -> (i32, i32) {
    %c0_i32 = arith.constant 0 : i32
    %c0_i32_0 = arith.constant 0 : i32
    %c0_i32_1 = arith.constant 0 : i32
    return %c0_i32, %c0_i32_0 : i32, i32
  }
  func.func @transform_5(%arg0: i32) -> (i32, i32) {
    %c0_i32 = arith.constant 0 : i32
    %c0_i32_0 = arith.constant 0 : i32
    %c0_i32_1 = arith.constant 0 : i32
    return %c0_i32, %c0_i32_0 : i32, i32
  }
  func.func @transform_6(%arg0: i32) -> (i32, i32) {
    %c0_i32 = arith.constant 0 : i32
    %c0_i32_0 = arith.constant 0 : i32
    %c0_i32_1 = arith.constant 0 : i32
    return %c0_i32, %c0_i32_0 : i32, i32
  }
  func.func @transform_7(%arg0: i32) -> (i32, i32) {
    %c0_i32 = arith.constant 0 : i32
    %c0_i32_0 = arith.constant 0 : i32
    %c0_i32_1 = arith.constant 0 : i32
    return %c0_i32, %c0_i32_0 : i32, i32
  }
  func.func @transform_8(%arg0: i32) -> (i32, i32) {
    %c0_i32 = arith.constant 0 : i32
    %c0_i32_0 = arith.constant 0 : i32
    %c0_i32_1 = arith.constant 0 : i32
    return %c0_i32, %c0_i32_0 : i32, i32
  }
  func.func @transform_9(%arg0: i32) -> (i32, i32) {
    %c0_i32 = arith.constant 0 : i32
    %c0_i32_0 = arith.constant 0 : i32
    %c0_i32_1 = arith.constant 0 : i32
    return %c0_i32, %c0_i32_0 : i32, i32
  }
  func.func @transform_10(%arg0: i32) -> (i32, i32) {
    %c0_i32 = arith.constant 0 : i32
    %c0_i32_0 = arith.constant 0 : i32
    %c0_i32_1 = arith.constant 0 : i32
    return %c0_i32, %c0_i32_0 : i32, i32
  }
  func.func @transform_11(%arg0: i32) -> (i32, i32) {
    %c0_i32 = arith.constant 0 : i32
    %c0_i32_0 = arith.constant 0 : i32
    %c0_i32_1 = arith.constant 0 : i32
    return %c0_i32, %c0_i32_0 : i32, i32
  }
  func.func @transform_12(%arg0: i32) -> (i32, i32) {
    %c0_i32 = arith.constant 0 : i32
    %c0_i32_0 = arith.constant 0 : i32
    %c0_i32_1 = arith.constant 0 : i32
    return %c0_i32, %c0_i32_0 : i32, i32
  }
  func.func @transform_13(%arg0: i32) -> (i32, i32) {
    %c0_i32 = arith.constant 0 : i32
    %c0_i32_0 = arith.constant 0 : i32
    %c0_i32_1 = arith.constant 0 : i32
    return %c0_i32, %c0_i32_0 : i32, i32
  }
  func.func @transform_14(%arg0: i32) -> (i32, i32) {
    %c0_i32 = arith.constant 0 : i32
    %c0_i32_0 = arith.constant 0 : i32
    %c0_i32_1 = arith.constant 0 : i32
    return %c0_i32, %c0_i32_0 : i32, i32
  }
  func.func @transform_15(%arg0: i32) -> (i32, i32) {
    %c0_i32 = arith.constant 0 : i32
    %c0_i32_0 = arith.constant 0 : i32
    %c0_i32_1 = arith.constant 0 : i32
    return %c0_i32, %c0_i32_0 : i32, i32
  }
  func.func @transform_16(%arg0: i32) -> (i32, i32) {
    %c0_i32 = arith.constant 0 : i32
    %c0_i32_0 = arith.constant 0 : i32
    %c0_i32_1 = arith.constant 0 : i32
    return %c0_i32, %c0_i32_0 : i32, i32
  }
  func.func @transform_17(%arg0: i32) -> (i32, i32) {
    %c0_i32 = arith.constant 0 : i32
    %c0_i32_0 = arith.constant 0 : i32
    return %arg0, %c0_i32 : i32, i32
  }
}

module attributes {stable_mosaic.version = 11 : i64} {
  func.func @mlp_kernel(%arg0: i32, %arg1: memref<8x128xf32, #tpu.memory_space<vmem>>, %arg2: memref<128x128xbf16, #tpu.memory_space<vmem>>, %arg3: memref<1x128xf32, #tpu.memory_space<vmem>>, %arg4: memref<128x128xbf16, #tpu.memory_space<vmem>>, %arg5: memref<1x128xf32, #tpu.memory_space<vmem>>, %arg6: memref<1x128xf32, #tpu.memory_space<vmem>>, %arg7: memref<1x128xf32, #tpu.memory_space<vmem>>, %arg8: memref<128x128xbf16, #tpu.memory_space<vmem>>, %arg9: memref<1x128xf32, #tpu.memory_space<vmem>>, %arg10: memref<1x128xf32, #tpu.memory_space<vmem>>, %arg11: memref<1x128xf32, #tpu.memory_space<vmem>>, %arg12: memref<128x128xbf16, #tpu.memory_space<vmem>>, %arg13: memref<1x128xf32, #tpu.memory_space<vmem>>, %arg14: memref<1x128xf32, #tpu.memory_space<vmem>>, %arg15: memref<1x128xf32, #tpu.memory_space<vmem>>, %arg16: memref<128x128xbf16, #tpu.memory_space<vmem>>, %arg17: memref<1x128xf32, #tpu.memory_space<vmem>>, %arg18: memref<8x128xf32, #tpu.memory_space<vmem>>) attributes {dimension_semantics = [#tpu.dimension_semantics<parallel>], iteration_bounds = array<i64: 1>, scalar_prefetch = 0 : i64, scratch_operands = 0 : i64, tpu.core_type = #tpu.core_type<tc>, window_params = [{transform_indices = @transform_0, window_bounds = array<i64: 8, 128>}, {pipeline_mode = #tpu.pipeline_mode<synchronous>, transform_indices = @transform_1, window_bounds = array<i64: 128, 128>}, {pipeline_mode = #tpu.pipeline_mode<synchronous>, transform_indices = @transform_2, window_bounds = array<i64: 1, 128>}, {pipeline_mode = #tpu.pipeline_mode<synchronous>, transform_indices = @transform_3, window_bounds = array<i64: 128, 128>}, {pipeline_mode = #tpu.pipeline_mode<synchronous>, transform_indices = @transform_4, window_bounds = array<i64: 1, 128>}, {pipeline_mode = #tpu.pipeline_mode<synchronous>, transform_indices = @transform_5, window_bounds = array<i64: 1, 128>}, {pipeline_mode = #tpu.pipeline_mode<synchronous>, transform_indices = @transform_6, window_bounds = array<i64: 1, 128>}, {pipeline_mode = #tpu.pipeline_mode<synchronous>, transform_indices = @transform_7, window_bounds = array<i64: 128, 128>}, {pipeline_mode = #tpu.pipeline_mode<synchronous>, transform_indices = @transform_8, window_bounds = array<i64: 1, 128>}, {pipeline_mode = #tpu.pipeline_mode<synchronous>, transform_indices = @transform_9, window_bounds = array<i64: 1, 128>}, {pipeline_mode = #tpu.pipeline_mode<synchronous>, transform_indices = @transform_10, window_bounds = array<i64: 1, 128>}, {pipeline_mode = #tpu.pipeline_mode<synchronous>, transform_indices = @transform_11, window_bounds = array<i64: 128, 128>}, {pipeline_mode = #tpu.pipeline_mode<synchronous>, transform_indices = @transform_12, window_bounds = array<i64: 1, 128>}, {pipeline_mode = #tpu.pipeline_mode<synchronous>, transform_indices = @transform_13, window_bounds = array<i64: 1, 128>}, {pipeline_mode = #tpu.pipeline_mode<synchronous>, transform_indices = @transform_14, window_bounds = array<i64: 1, 128>}, {pipeline_mode = #tpu.pipeline_mode<synchronous>, transform_indices = @transform_15, window_bounds = array<i64: 128, 128>}, {pipeline_mode = #tpu.pipeline_mode<synchronous>, transform_indices = @transform_16, window_bounds = array<i64: 1, 128>}, {transform_indices = @transform_17, window_bounds = array<i64: 8, 128>}]} {
    %c0 = arith.constant 0 : index
    %c0_0 = arith.constant 0 : index
    %0 = vector.load %arg1[%c0, %c0_0] : memref<8x128xf32, #tpu.memory_space<vmem>>, vector<8x128xf32>
    %1 = arith.truncf %0 : vector<8x128xf32> to vector<8x128xbf16>
    %c0_1 = arith.constant 0 : index
    %c0_2 = arith.constant 0 : index
    %2 = vector.load %arg2[%c0_1, %c0_2] : memref<128x128xbf16, #tpu.memory_space<vmem>>, vector<128x128xbf16>
    %cst = arith.constant dense<0.000000e+00> : vector<8x128xf32>
    %3 = tpu.matmul %1, %2, %cst {dimension_numbers = #tpu.dot_dimension_numbers<[1], [0], [0], [1], [0, 0, 1, 1], [], []>} : vector<8x128xbf16>, vector<128x128xbf16>, vector<8x128xf32> -> vector<8x128xf32>
    %c0_3 = arith.constant 0 : index
    %c0_4 = arith.constant 0 : index
    %4 = vector.load %arg3[%c0_3, %c0_4] : memref<1x128xf32, #tpu.memory_space<vmem>>, vector<1x128xf32>
    %5 = vector.broadcast %4 : vector<1x128xf32> to vector<8x128xf32>
    %6 = arith.addf %3, %5 : vector<8x128xf32>
    %cst_5 = arith.constant 0.000000e+00 : f32
    %7 = vector.broadcast %cst_5 : f32 to vector<8x128xf32>
    %8 = arith.maximumf %6, %7 : vector<8x128xf32>
    %9 = arith.truncf %8 : vector<8x128xf32> to vector<8x128xbf16>
    %c0_6 = arith.constant 0 : index
    %c0_7 = arith.constant 0 : index
    %10 = vector.load %arg4[%c0_6, %c0_7] : memref<128x128xbf16, #tpu.memory_space<vmem>>, vector<128x128xbf16>
    %cst_8 = arith.constant dense<0.000000e+00> : vector<8x128xf32>
    %11 = tpu.matmul %9, %10, %cst_8 {dimension_numbers = #tpu.dot_dimension_numbers<[1], [0], [0], [1], [0, 0, 1, 1], [], []>} : vector<8x128xbf16>, vector<128x128xbf16>, vector<8x128xf32> -> vector<8x128xf32>
    %c0_9 = arith.constant 0 : index
    %c0_10 = arith.constant 0 : index
    %12 = vector.load %arg5[%c0_9, %c0_10] : memref<1x128xf32, #tpu.memory_space<vmem>>, vector<1x128xf32>
    %13 = vector.broadcast %12 : vector<1x128xf32> to vector<8x128xf32>
    %14 = arith.addf %11, %13 : vector<8x128xf32>
    %cst_11 = arith.constant dense<0.000000e+00> : vector<8xf32>
    %15 = vector.multi_reduction <add>, %14, %cst_11 [1] : vector<8x128xf32> to vector<8xf32>
    %16 = vector.shape_cast %15 : vector<8xf32> to vector<8x1xf32>
    %cst_12 = arith.constant 3.125000e-02 : f32
    %17 = vector.broadcast %cst_12 : f32 to vector<8x1xf32>
    %18 = arith.mulf %16, %17 : vector<8x1xf32>
    %19 = vector.broadcast %18 : vector<8x1xf32> to vector<8x128xf32>
    %20 = arith.subf %14, %19 : vector<8x128xf32>
    %21 = arith.mulf %20, %20 : vector<8x128xf32>
    %cst_13 = arith.constant dense<0.000000e+00> : vector<8xf32>
    %22 = vector.multi_reduction <add>, %21, %cst_13 [1] : vector<8x128xf32> to vector<8xf32>
    %23 = vector.shape_cast %22 : vector<8xf32> to vector<8x1xf32>
    %24 = arith.mulf %18, %18 : vector<8x1xf32>
    %cst_14 = arith.constant 9.600000e+01 : f32
    %25 = vector.broadcast %cst_14 : f32 to vector<8x1xf32>
    %26 = arith.mulf %25, %24 : vector<8x1xf32>
    %27 = arith.subf %23, %26 : vector<8x1xf32>
    %cst_15 = arith.constant 3.125000e-02 : f32
    %28 = vector.broadcast %cst_15 : f32 to vector<8x1xf32>
    %29 = arith.mulf %27, %28 : vector<8x1xf32>
    %cst_16 = arith.constant 9.99999974E-6 : f32
    %30 = vector.broadcast %cst_16 : f32 to vector<8x1xf32>
    %31 = arith.addf %29, %30 : vector<8x1xf32>
    %32 = math.rsqrt %31 : vector<8x1xf32>
    %33 = vector.broadcast %32 : vector<8x1xf32> to vector<8x128xf32>
    %34 = arith.mulf %20, %33 : vector<8x128xf32>
    %c0_17 = arith.constant 0 : index
    %c0_18 = arith.constant 0 : index
    %35 = vector.load %arg6[%c0_17, %c0_18] : memref<1x128xf32, #tpu.memory_space<vmem>>, vector<1x128xf32>
    %36 = vector.broadcast %35 : vector<1x128xf32> to vector<8x128xf32>
    %37 = arith.mulf %34, %36 : vector<8x128xf32>
    %c0_19 = arith.constant 0 : index
    %c0_20 = arith.constant 0 : index
    %38 = vector.load %arg7[%c0_19, %c0_20] : memref<1x128xf32, #tpu.memory_space<vmem>>, vector<1x128xf32>
    %39 = vector.broadcast %38 : vector<1x128xf32> to vector<8x128xf32>
    %40 = arith.addf %37, %39 : vector<8x128xf32>
    %cst_21 = arith.constant 0.000000e+00 : f32
    %41 = vector.broadcast %cst_21 : f32 to vector<8x128xf32>
    %42 = arith.maximumf %40, %41 : vector<8x128xf32>
    %43 = arith.truncf %42 : vector<8x128xf32> to vector<8x128xbf16>
    %c0_22 = arith.constant 0 : index
    %c0_23 = arith.constant 0 : index
    %44 = vector.load %arg8[%c0_22, %c0_23] : memref<128x128xbf16, #tpu.memory_space<vmem>>, vector<128x128xbf16>
    %cst_24 = arith.constant dense<0.000000e+00> : vector<8x128xf32>
    %45 = tpu.matmul %43, %44, %cst_24 {dimension_numbers = #tpu.dot_dimension_numbers<[1], [0], [0], [1], [0, 0, 1, 1], [], []>} : vector<8x128xbf16>, vector<128x128xbf16>, vector<8x128xf32> -> vector<8x128xf32>
    %c0_25 = arith.constant 0 : index
    %c0_26 = arith.constant 0 : index
    %46 = vector.load %arg9[%c0_25, %c0_26] : memref<1x128xf32, #tpu.memory_space<vmem>>, vector<1x128xf32>
    %47 = vector.broadcast %46 : vector<1x128xf32> to vector<8x128xf32>
    %48 = arith.addf %45, %47 : vector<8x128xf32>
    %cst_27 = arith.constant dense<0.000000e+00> : vector<8xf32>
    %49 = vector.multi_reduction <add>, %48, %cst_27 [1] : vector<8x128xf32> to vector<8xf32>
    %50 = vector.shape_cast %49 : vector<8xf32> to vector<8x1xf32>
    %cst_28 = arith.constant 3.125000e-02 : f32
    %51 = vector.broadcast %cst_28 : f32 to vector<8x1xf32>
    %52 = arith.mulf %50, %51 : vector<8x1xf32>
    %53 = vector.broadcast %52 : vector<8x1xf32> to vector<8x128xf32>
    %54 = arith.subf %48, %53 : vector<8x128xf32>
    %55 = arith.mulf %54, %54 : vector<8x128xf32>
    %cst_29 = arith.constant dense<0.000000e+00> : vector<8xf32>
    %56 = vector.multi_reduction <add>, %55, %cst_29 [1] : vector<8x128xf32> to vector<8xf32>
    %57 = vector.shape_cast %56 : vector<8xf32> to vector<8x1xf32>
    %58 = arith.mulf %52, %52 : vector<8x1xf32>
    %cst_30 = arith.constant 9.600000e+01 : f32
    %59 = vector.broadcast %cst_30 : f32 to vector<8x1xf32>
    %60 = arith.mulf %59, %58 : vector<8x1xf32>
    %61 = arith.subf %57, %60 : vector<8x1xf32>
    %cst_31 = arith.constant 3.125000e-02 : f32
    %62 = vector.broadcast %cst_31 : f32 to vector<8x1xf32>
    %63 = arith.mulf %61, %62 : vector<8x1xf32>
    %cst_32 = arith.constant 9.99999974E-6 : f32
    %64 = vector.broadcast %cst_32 : f32 to vector<8x1xf32>
    %65 = arith.addf %63, %64 : vector<8x1xf32>
    %66 = math.rsqrt %65 : vector<8x1xf32>
    %67 = vector.broadcast %66 : vector<8x1xf32> to vector<8x128xf32>
    %68 = arith.mulf %54, %67 : vector<8x128xf32>
    %c0_33 = arith.constant 0 : index
    %c0_34 = arith.constant 0 : index
    %69 = vector.load %arg10[%c0_33, %c0_34] : memref<1x128xf32, #tpu.memory_space<vmem>>, vector<1x128xf32>
    %70 = vector.broadcast %69 : vector<1x128xf32> to vector<8x128xf32>
    %71 = arith.mulf %68, %70 : vector<8x128xf32>
    %c0_35 = arith.constant 0 : index
    %c0_36 = arith.constant 0 : index
    %72 = vector.load %arg11[%c0_35, %c0_36] : memref<1x128xf32, #tpu.memory_space<vmem>>, vector<1x128xf32>
    %73 = vector.broadcast %72 : vector<1x128xf32> to vector<8x128xf32>
    %74 = arith.addf %71, %73 : vector<8x128xf32>
    %cst_37 = arith.constant 0.000000e+00 : f32
    %75 = vector.broadcast %cst_37 : f32 to vector<8x128xf32>
    %76 = arith.maximumf %74, %75 : vector<8x128xf32>
    %77 = arith.truncf %76 : vector<8x128xf32> to vector<8x128xbf16>
    %c0_38 = arith.constant 0 : index
    %c0_39 = arith.constant 0 : index
    %78 = vector.load %arg12[%c0_38, %c0_39] : memref<128x128xbf16, #tpu.memory_space<vmem>>, vector<128x128xbf16>
    %cst_40 = arith.constant dense<0.000000e+00> : vector<8x128xf32>
    %79 = tpu.matmul %77, %78, %cst_40 {dimension_numbers = #tpu.dot_dimension_numbers<[1], [0], [0], [1], [0, 0, 1, 1], [], []>} : vector<8x128xbf16>, vector<128x128xbf16>, vector<8x128xf32> -> vector<8x128xf32>
    %c0_41 = arith.constant 0 : index
    %c0_42 = arith.constant 0 : index
    %80 = vector.load %arg13[%c0_41, %c0_42] : memref<1x128xf32, #tpu.memory_space<vmem>>, vector<1x128xf32>
    %81 = vector.broadcast %80 : vector<1x128xf32> to vector<8x128xf32>
    %82 = arith.addf %79, %81 : vector<8x128xf32>
    %cst_43 = arith.constant dense<0.000000e+00> : vector<8xf32>
    %83 = vector.multi_reduction <add>, %82, %cst_43 [1] : vector<8x128xf32> to vector<8xf32>
    %84 = vector.shape_cast %83 : vector<8xf32> to vector<8x1xf32>
    %cst_44 = arith.constant 3.125000e-02 : f32
    %85 = vector.broadcast %cst_44 : f32 to vector<8x1xf32>
    %86 = arith.mulf %84, %85 : vector<8x1xf32>
    %87 = vector.broadcast %86 : vector<8x1xf32> to vector<8x128xf32>
    %88 = arith.subf %82, %87 : vector<8x128xf32>
    %89 = arith.mulf %88, %88 : vector<8x128xf32>
    %cst_45 = arith.constant dense<0.000000e+00> : vector<8xf32>
    %90 = vector.multi_reduction <add>, %89, %cst_45 [1] : vector<8x128xf32> to vector<8xf32>
    %91 = vector.shape_cast %90 : vector<8xf32> to vector<8x1xf32>
    %92 = arith.mulf %86, %86 : vector<8x1xf32>
    %cst_46 = arith.constant 9.600000e+01 : f32
    %93 = vector.broadcast %cst_46 : f32 to vector<8x1xf32>
    %94 = arith.mulf %93, %92 : vector<8x1xf32>
    %95 = arith.subf %91, %94 : vector<8x1xf32>
    %cst_47 = arith.constant 3.125000e-02 : f32
    %96 = vector.broadcast %cst_47 : f32 to vector<8x1xf32>
    %97 = arith.mulf %95, %96 : vector<8x1xf32>
    %cst_48 = arith.constant 9.99999974E-6 : f32
    %98 = vector.broadcast %cst_48 : f32 to vector<8x1xf32>
    %99 = arith.addf %97, %98 : vector<8x1xf32>
    %100 = math.rsqrt %99 : vector<8x1xf32>
    %101 = vector.broadcast %100 : vector<8x1xf32> to vector<8x128xf32>
    %102 = arith.mulf %88, %101 : vector<8x128xf32>
    %c0_49 = arith.constant 0 : index
    %c0_50 = arith.constant 0 : index
    %103 = vector.load %arg14[%c0_49, %c0_50] : memref<1x128xf32, #tpu.memory_space<vmem>>, vector<1x128xf32>
    %104 = vector.broadcast %103 : vector<1x128xf32> to vector<8x128xf32>
    %105 = arith.mulf %102, %104 : vector<8x128xf32>
    %c0_51 = arith.constant 0 : index
    %c0_52 = arith.constant 0 : index
    %106 = vector.load %arg15[%c0_51, %c0_52] : memref<1x128xf32, #tpu.memory_space<vmem>>, vector<1x128xf32>
    %107 = vector.broadcast %106 : vector<1x128xf32> to vector<8x128xf32>
    %108 = arith.addf %105, %107 : vector<8x128xf32>
    %cst_53 = arith.constant 0.000000e+00 : f32
    %109 = vector.broadcast %cst_53 : f32 to vector<8x128xf32>
    %110 = arith.maximumf %108, %109 : vector<8x128xf32>
    %111 = arith.truncf %110 : vector<8x128xf32> to vector<8x128xbf16>
    %c0_54 = arith.constant 0 : index
    %c0_55 = arith.constant 0 : index
    %112 = vector.load %arg16[%c0_54, %c0_55] : memref<128x128xbf16, #tpu.memory_space<vmem>>, vector<128x128xbf16>
    %cst_56 = arith.constant dense<0.000000e+00> : vector<8x128xf32>
    %113 = tpu.matmul %111, %112, %cst_56 {dimension_numbers = #tpu.dot_dimension_numbers<[1], [0], [0], [1], [0, 0, 1, 1], [], []>} : vector<8x128xbf16>, vector<128x128xbf16>, vector<8x128xf32> -> vector<8x128xf32>
    %c0_57 = arith.constant 0 : index
    %c0_58 = arith.constant 0 : index
    %114 = vector.load %arg17[%c0_57, %c0_58] : memref<1x128xf32, #tpu.memory_space<vmem>>, vector<1x128xf32>
    %115 = vector.broadcast %114 : vector<1x128xf32> to vector<8x128xf32>
    %116 = arith.addf %113, %115 : vector<8x128xf32>
    %cst_59 = arith.constant 0.000000e+00 : f32
    %117 = vector.broadcast %cst_59 : f32 to vector<8x128xf32>
    %118 = arith.cmpf ogt, %116, %117 : vector<8x128xf32>
    %119 = arith.extui %118 : vector<8x128xi1> to vector<8x128xi32>
    %120 = arith.sitofp %119 : vector<8x128xi32> to vector<8x128xf32>
    %c0_60 = arith.constant 0 : index
    %c0_61 = arith.constant 0 : index
    %121 = vector.load %arg18[%c0_60, %c0_61] : memref<8x128xf32, #tpu.memory_space<vmem>>, vector<8x128xf32>
    tpu.vector_store %arg18[%c0_60, %c0_61], %120 {strides = array<i32>} : memref<8x128xf32, #tpu.memory_space<vmem>>, vector<8x128xf32>,
    return
  }
  func.func @transform_0(%arg0: i32) -> (i32, i32) {
    %c0_i32 = arith.constant 0 : i32
    %c0_i32_0 = arith.constant 0 : i32
    return %arg0, %c0_i32 : i32, i32
  }
  func.func @transform_1(%arg0: i32) -> (i32, i32) {
    %c0_i32 = arith.constant 0 : i32
    %c0_i32_0 = arith.constant 0 : i32
    %c0_i32_1 = arith.constant 0 : i32
    return %c0_i32, %c0_i32_0 : i32, i32
  }
  func.func @transform_2(%arg0: i32) -> (i32, i32) {
    %c0_i32 = arith.constant 0 : i32
    %c0_i32_0 = arith.constant 0 : i32
    %c0_i32_1 = arith.constant 0 : i32
    return %c0_i32, %c0_i32_0 : i32, i32
  }
  func.func @transform_3(%arg0: i32) -> (i32, i32) {
    %c0_i32 = arith.constant 0 : i32
    %c0_i32_0 = arith.constant 0 : i32
    %c0_i32_1 = arith.constant 0 : i32
    return %c0_i32, %c0_i32_0 : i32, i32
  }
  func.func @transform_4(%arg0: i32) -> (i32, i32) {
    %c0_i32 = arith.constant 0 : i32
    %c0_i32_0 = arith.constant 0 : i32
    %c0_i32_1 = arith.constant 0 : i32
    return %c0_i32, %c0_i32_0 : i32, i32
  }
  func.func @transform_5(%arg0: i32) -> (i32, i32) {
    %c0_i32 = arith.constant 0 : i32
    %c0_i32_0 = arith.constant 0 : i32
    %c0_i32_1 = arith.constant 0 : i32
    return %c0_i32, %c0_i32_0 : i32, i32
  }
  func.func @transform_6(%arg0: i32) -> (i32, i32) {
    %c0_i32 = arith.constant 0 : i32
    %c0_i32_0 = arith.constant 0 : i32
    %c0_i32_1 = arith.constant 0 : i32
    return %c0_i32, %c0_i32_0 : i32, i32
  }
  func.func @transform_7(%arg0: i32) -> (i32, i32) {
    %c0_i32 = arith.constant 0 : i32
    %c0_i32_0 = arith.constant 0 : i32
    %c0_i32_1 = arith.constant 0 : i32
    return %c0_i32, %c0_i32_0 : i32, i32
  }
  func.func @transform_8(%arg0: i32) -> (i32, i32) {
    %c0_i32 = arith.constant 0 : i32
    %c0_i32_0 = arith.constant 0 : i32
    %c0_i32_1 = arith.constant 0 : i32
    return %c0_i32, %c0_i32_0 : i32, i32
  }
  func.func @transform_9(%arg0: i32) -> (i32, i32) {
    %c0_i32 = arith.constant 0 : i32
    %c0_i32_0 = arith.constant 0 : i32
    %c0_i32_1 = arith.constant 0 : i32
    return %c0_i32, %c0_i32_0 : i32, i32
  }
  func.func @transform_10(%arg0: i32) -> (i32, i32) {
    %c0_i32 = arith.constant 0 : i32
    %c0_i32_0 = arith.constant 0 : i32
    %c0_i32_1 = arith.constant 0 : i32
    return %c0_i32, %c0_i32_0 : i32, i32
  }
  func.func @transform_11(%arg0: i32) -> (i32, i32) {
    %c0_i32 = arith.constant 0 : i32
    %c0_i32_0 = arith.constant 0 : i32
    %c0_i32_1 = arith.constant 0 : i32
    return %c0_i32, %c0_i32_0 : i32, i32
  }
  func.func @transform_12(%arg0: i32) -> (i32, i32) {
    %c0_i32 = arith.constant 0 : i32
    %c0_i32_0 = arith.constant 0 : i32
    %c0_i32_1 = arith.constant 0 : i32
    return %c0_i32, %c0_i32_0 : i32, i32
  }
  func.func @transform_13(%arg0: i32) -> (i32, i32) {
    %c0_i32 = arith.constant 0 : i32
    %c0_i32_0 = arith.constant 0 : i32
    %c0_i32_1 = arith.constant 0 : i32
    return %c0_i32, %c0_i32_0 : i32, i32
  }
  func.func @transform_14(%arg0: i32) -> (i32, i32) {
    %c0_i32 = arith.constant 0 : i32
    %c0_i32_0 = arith.constant 0 : i32
    %c0_i32_1 = arith.constant 0 : i32
    return %c0_i32, %c0_i32_0 : i32, i32
  }
  func.func @transform_15(%arg0: i32) -> (i32, i32) {
    %c0_i32 = arith.constant 0 : i32
    %c0_i32_0 = arith.constant 0 : i32
    %c0_i32_1 = arith.constant 0 : i32
    return %c0_i32, %c0_i32_0 : i32, i32
  }
  func.func @transform_16(%arg0: i32) -> (i32, i32) {
    %c0_i32 = arith.constant 0 : i32
    %c0_i32_0 = arith.constant 0 : i32
    %c0_i32_1 = arith.constant 0 : i32
    return %c0_i32, %c0_i32_0 : i32, i32
  }
  func.func @transform_17(%arg0: i32) -> (i32, i32) {
    %c0_i32 = arith.constant 0 : i32
    %c0_i32_0 = arith.constant 0 : i32
    return %arg0, %c0_i32 : i32, i32
  }
}

</mosaic_0001>

<llo_original>
// kernel: tpu_custom_call.1
$region0: #{tpu_custom_call.1}
  #allocation0 [shape = 'u32[]', space=smem, size = 0x4, offset = 0x4, fixed_abs, tag = 'smem constant byte address 0x4 - core index']
  #allocation1 [shape = 'u32[72,128]{1,0:T(1,128)}', space=vmem, size = 0x9000, scoped, tag = 'internal scratch']
  %s0 = inlined_call_operand.hbm [shape: f32[8,128], index: 0, kind: input, shape index: {}]
  %s1 = inlined_call_operand.hbm [shape: bf16[128,128], index: 1, kind: input, shape index: {}]
  %s2 = inlined_call_operand.vmem [shape: f32[1,128], index: 2, kind: input, shape index: {}]
  %s3 = inlined_call_operand.hbm [shape: bf16[128,128], index: 3, kind: input, shape index: {}]
  %s4 = inlined_call_operand.vmem [shape: f32[1,128], index: 4, kind: input, shape index: {}]
  %s5 = inlined_call_operand.vmem [shape: f32[1,128], index: 5, kind: input, shape index: {}]
  %s6 = inlined_call_operand.vmem [shape: f32[1,128], index: 6, kind: input, shape index: {}]
  %s7 = inlined_call_operand.hbm [shape: bf16[128,128], index: 7, kind: input, shape index: {}]
  %s8 = inlined_call_operand.vmem [shape: f32[1,128], index: 8, kind: input, shape index: {}]
  %s9 = inlined_call_operand.vmem [shape: f32[1,128], index: 9, kind: input, shape index: {}]
  %s10 = inlined_call_operand.vmem [shape: f32[1,128], index: 10, kind: input, shape index: {}]
  %s11 = inlined_call_operand.hbm [shape: bf16[128,128], index: 11, kind: input, shape index: {}]
  %s12 = inlined_call_operand.vmem [shape: f32[1,128], index: 12, kind: input, shape index: {}]
  %s13 = inlined_call_operand.vmem [shape: f32[1,128], index: 13, kind: input, shape index: {}]
  %s14 = inlined_call_operand.vmem [shape: f32[1,128], index: 14, kind: input, shape index: {}]
  %s15 = inlined_call_operand.hbm [shape: bf16[128,128], index: 15, kind: input, shape index: {}]
  %s16 = inlined_call_operand.vmem [shape: f32[1,128], index: 16, kind: input, shape index: {}]
  %s17 = inlined_call_operand.hbm [shape: f32[8,128], index: 17, kind: output, shape index: {}]
  %s18 = sld [smem:[#allocation0]]
  $region102: #{tpu_custom_call.1} parent=0
    _
  %s20 = ssub.s32 1, %s18
  %s21 = scalar_select 0, %s20, %s18
  $region1: #{tpu_custom_call.1} parent=0
    #allocation2 [shape = 'u8[4096]{0}', space=vmem, size = 0x1000, scoped, tag = 'input window, operand 0, single buffered']
    #allocation3 [shape = 's32[1]{0}', space=sflag, size = 0x4, scoped, tag = 'scoped memory for tpu_custom_call.1']
    #allocation4 [shape = 's32[1]{0}', space=sflag, size = 0x4, scoped, tag = 'scoped memory for tpu_custom_call.1']
    #allocation5 [shape = 'u8[32768]{0}', space=vmem, size = 0x8000, scoped, tag = 'input window, operand 1, single buffered']
    #allocation6 [shape = 's32[1]{0}', space=sflag, size = 0x4, scoped, tag = 'scoped memory for tpu_custom_call.1']
    #allocation7 [shape = 'u8[32768]{0}', space=vmem, size = 0x8000, scoped, tag = 'input window, operand 3, single buffered']
    #allocation8 [shape = 'u8[32768]{0}', space=vmem, size = 0x8000, scoped, tag = 'input window, operand 7, single buffered']
    #allocation9 [shape = 's32[1]{0}', space=sflag, size = 0x4, scoped, tag = 'scoped memory for tpu_custom_call.1']
    #allocation10 [shape = 'u8[32768]{0}', space=vmem, size = 0x8000, scoped, tag = 'input window, operand 11, single buffered']
    #allocation11 [shape = 'u8[32768]{0}', space=vmem, size = 0x8000, scoped, tag = 'input window, operand 15, single buffered']
    #allocation12 [shape = 's32[1]{0}', space=sflag, size = 0x4, scoped, tag = 'scoped memory for tpu_custom_call.1']
    #allocation13 [shape = 'u8[4096]{0}', space=vmem, size = 0x1000, scoped, tag = 'output window, operand 0, single buffered']
    %22 = vsyncpa [#allocation3], 0
    %23 = vsyncpa [#allocation6], 0
    %24 = vsyncpa [#allocation9], 0
    %25 = vsyncpa [#allocation12], 0
    %26 = vsyncpa [#allocation4], 0
    // Predicated region
    $region2: #{tpu_custom_call.1} parent=1 // pred_check
      _
    $region3: #{tpu_custom_call.1} parent=1 // pred_check_branch
      %28 = sbr.rel (0) target = $region5
    $region4: #{tpu_custom_call.1} parent=1 // pred_region
      %30 = vsyncadd [#allocation3], 0
      %s32 = sshll.u32 %s0, 4
      %s33 = int_to_ptr.hbm [resolvable:$true] %s32
      %s34 = sshll.u32 [#allocation2], 4
      %s35 = int_to_ptr.vmem [resolvable:$true] %s34
      %37 = dma.hbm_to_vmem [thread:$0]  %s33, 128, %s35, [#allocation3]
    $region5: #{tpu_custom_call.1} parent=1 // pred_fallthru
      _
    // Predicated region
    $region6: #{tpu_custom_call.1} parent=1 // pred_check
      _
    $region7: #{tpu_custom_call.1} parent=1 // pred_check_branch
      %39 = sbr.rel (0) target = $region9
    $region8: #{tpu_custom_call.1} parent=1 // pred_region
      %41 = vsyncadd [#allocation6], 0
      %s42 = sshll.u32 %s1, 4
      %s43 = int_to_ptr.hbm [resolvable:$true] %s42
      %s44 = sshll.u32 [#allocation5], 4
      %s45 = int_to_ptr.vmem [resolvable:$true] %s44
      %50 = dma.hbm_to_vmem [thread:$0]  %s43, 1024, %s45, [#allocation6], 64, 64, 4
    $region9: #{tpu_custom_call.1} parent=1 // pred_fallthru
      _
    // Predicated region
    $region10: #{tpu_custom_call.1} parent=1 // pred_check
      _
    $region11: #{tpu_custom_call.1} parent=1 // pred_check_branch
      %52 = sbr.rel (0) target = $region13
    $region12: #{tpu_custom_call.1} parent=1 // pred_region
      _
    $region13: #{tpu_custom_call.1} parent=1 // pred_fallthru
      _
    // Predicated region
    $region14: #{tpu_custom_call.1} parent=1 // pred_check
      _
    $region15: #{tpu_custom_call.1} parent=1 // pred_check_branch
      %54 = sbr.rel (0) target = $region17
    $region16: #{tpu_custom_call.1} parent=1 // pred_region
      %56 = vsyncadd [#allocation6], 0
      %s57 = sshll.u32 %s3, 4
      %s58 = int_to_ptr.hbm [resolvable:$true] %s57
      %s59 = sshll.u32 [#allocation7], 4
      %s60 = int_to_ptr.vmem [resolvable:$true] %s59
      %65 = dma.hbm_to_vmem [thread:$0]  %s58, 1024, %s60, [#allocation6], 64, 64, 4
    $region17: #{tpu_custom_call.1} parent=1 // pred_fallthru
      _
    // Predicated region
    $region18: #{tpu_custom_call.1} parent=1 // pred_check
      _
    $region19: #{tpu_custom_call.1} parent=1 // pred_check_branch
      %67 = sbr.rel (0) target = $region21
    $region20: #{tpu_custom_call.1} parent=1 // pred_region
      _
    $region21: #{tpu_custom_call.1} parent=1 // pred_fallthru
      _
    // Predicated region
    $region22: #{tpu_custom_call.1} parent=1 // pred_check
      _
    $region23: #{tpu_custom_call.1} parent=1 // pred_check_branch
      %69 = sbr.rel (0) target = $region25
    $region24: #{tpu_custom_call.1} parent=1 // pred_region
      _
    $region25: #{tpu_custom_call.1} parent=1 // pred_fallthru
      _
    // Predicated region
    $region26: #{tpu_custom_call.1} parent=1 // pred_check
      _
    $region27: #{tpu_custom_call.1} parent=1 // pred_check_branch
      %71 = sbr.rel (0) target = $region29
    $region28: #{tpu_custom_call.1} parent=1 // pred_region
      _
    $region29: #{tpu_custom_call.1} parent=1 // pred_fallthru
      _
    // Predicated region
    $region30: #{tpu_custom_call.1} parent=1 // pred_check
      _
    $region31: #{tpu_custom_call.1} parent=1 // pred_check_branch
      %73 = sbr.rel (0) target = $region33
    $region32: #{tpu_custom_call.1} parent=1 // pred_region
      %75 = vsyncadd [#allocation9], 0
      %s76 = sshll.u32 %s7, 4
      %s77 = int_to_ptr.hbm [resolvable:$true] %s76
      %s78 = sshll.u32 [#allocation8], 4
      %s79 = int_to_ptr.vmem [resolvable:$true] %s78
      %84 = dma.hbm_to_vmem [thread:$0]  %s77, 1024, %s79, [#allocation9], 64, 64, 4
    $region33: #{tpu_custom_call.1} parent=1 // pred_fallthru
      _
    // Predicated region
    $region34: #{tpu_custom_call.1} parent=1 // pred_check
      _
    $region35: #{tpu_custom_call.1} parent=1 // pred_check_branch
      %86 = sbr.rel (0) target = $region37
    $region36: #{tpu_custom_call.1} parent=1 // pred_region
      _
    $region37: #{tpu_custom_call.1} parent=1 // pred_fallthru
      _
    // Predicated region
    $region38: #{tpu_custom_call.1} parent=1 // pred_check
      _
    $region39: #{tpu_custom_call.1} parent=1 // pred_check_branch
      %88 = sbr.rel (0) target = $region41
    $region40: #{tpu_custom_call.1} parent=1 // pred_region
      _
    $region41: #{tpu_custom_call.1} parent=1 // pred_fallthru
      _
    // Predicated region
    $region42: #{tpu_custom_call.1} parent=1 // pred_check
      _
    $region43: #{tpu_custom_call.1} parent=1 // pred_check_branch
      %90 = sbr.rel (0) target = $region45
    $region44: #{tpu_custom_call.1} parent=1 // pred_region
      _
    $region45: #{tpu_custom_call.1} parent=1 // pred_fallthru
      _
    // Predicated region
    $region46: #{tpu_custom_call.1} parent=1 // pred_check
      _
    $region47: #{tpu_custom_call.1} parent=1 // pred_check_branch
      %92 = sbr.rel (0) target = $region49
    $region48: #{tpu_custom_call.1} parent=1 // pred_region
      %94 = vsyncadd [#allocation9], 0
      %s95 = sshll.u32 %s11, 4
      %s96 = int_to_ptr.hbm [resolvable:$true] %s95
      %s97 = sshll.u32 [#allocation10], 4
      %s98 = int_to_ptr.vmem [resolvable:$true] %s97
      %103 = dma.hbm_to_vmem [thread:$0]  %s96, 1024, %s98, [#allocation9], 64, 64, 4
    $region49: #{tpu_custom_call.1} parent=1 // pred_fallthru
      _
    // Predicated region
    $region50: #{tpu_custom_call.1} parent=1 // pred_check
      _
    $region51: #{tpu_custom_call.1} parent=1 // pred_check_branch
      %105 = sbr.rel (0) target = $region53
    $region52: #{tpu_custom_call.1} parent=1 // pred_region
      _
    $region53: #{tpu_custom_call.1} parent=1 // pred_fallthru
      _
    // Predicated region
    $region54: #{tpu_custom_call.1} parent=1 // pred_check
      _
    $region55: #{tpu_custom_call.1} parent=1 // pred_check_branch
      %107 = sbr.rel (0) target = $region57
    $region56: #{tpu_custom_call.1} parent=1 // pred_region
      _
    $region57: #{tpu_custom_call.1} parent=1 // pred_fallthru
      _
    // Predicated region
    $region58: #{tpu_custom_call.1} parent=1 // pred_check
      _
    $region59: #{tpu_custom_call.1} parent=1 // pred_check_branch
      %109 = sbr.rel (0) target = $region61
    $region60: #{tpu_custom_call.1} parent=1 // pred_region
      _
    $region61: #{tpu_custom_call.1} parent=1 // pred_fallthru
      _
    // Predicated region
    $region62: #{tpu_custom_call.1} parent=1 // pred_check
      _
    $region63: #{tpu_custom_call.1} parent=1 // pred_check_branch
      %111 = sbr.rel (0) target = $region65
    $region64: #{tpu_custom_call.1} parent=1 // pred_region
      %113 = vsyncadd [#allocation12], 0
      %s114 = sshll.u32 %s15, 4
      %s115 = int_to_ptr.hbm [resolvable:$true] %s114
      %s116 = sshll.u32 [#allocation11], 4
      %s117 = int_to_ptr.vmem [resolvable:$true] %s116
      %122 = dma.hbm_to_vmem [thread:$0]  %s115, 1024, %s117, [#allocation12], 64, 64, 4
    $region65: #{tpu_custom_call.1} parent=1 // pred_fallthru
      _
    // Predicated region
    $region66: #{tpu_custom_call.1} parent=1 // pred_check
      _
    $region67: #{tpu_custom_call.1} parent=1 // pred_check_branch
      %124 = sbr.rel (0) target = $region69
    $region68: #{tpu_custom_call.1} parent=1 // pred_region
      _
    $region69: #{tpu_custom_call.1} parent=1 // pred_fallthru
      _
    // Predicated region
    $region70: #{tpu_custom_call.1} parent=1 // pred_check
      _
    $region71: #{tpu_custom_call.1} parent=1 // pred_check_branch
      %126 = sbr.rel (0) target = $region73
    $region72: #{tpu_custom_call.1} parent=1 // pred_region
      %128 = dma.done [#allocation3], 128
    $region73: #{tpu_custom_call.1} parent=1 // pred_fallthru
      _
    // Predicated region
    $region74: #{tpu_custom_call.1} parent=1 // pred_check
      _
    $region75: #{tpu_custom_call.1} parent=1 // pred_check_branch
      %130 = sbr.rel (0) target = $region77
    $region76: #{tpu_custom_call.1} parent=1 // pred_region
      %132 = dma.done [#allocation6], 1024
    $region77: #{tpu_custom_call.1} parent=1 // pred_fallthru
      _
    // Predicated region
    $region78: #{tpu_custom_call.1} parent=1 // pred_check
      _
    $region79: #{tpu_custom_call.1} parent=1 // pred_check_branch
      %134 = sbr.rel (0) target = $region81
    $region80: #{tpu_custom_call.1} parent=1 // pred_region
      %136 = dma.done [#allocation6], 1024
    $region81: #{tpu_custom_call.1} parent=1 // pred_fallthru
      _
    // Predicated region
    $region82: #{tpu_custom_call.1} parent=1 // pred_check
      _
    $region83: #{tpu_custom_call.1} parent=1 // pred_check_branch
      %138 = sbr.rel (0) target = $region85
    $region84: #{tpu_custom_call.1} parent=1 // pred_region
      %140 = dma.done [#allocation9], 1024
    $region85: #{tpu_custom_call.1} parent=1 // pred_fallthru
      _
    // Predicated region
    $region86: #{tpu_custom_call.1} parent=1 // pred_check
      _
    $region87: #{tpu_custom_call.1} parent=1 // pred_check_branch
      %142 = sbr.rel (0) target = $region89
    $region88: #{tpu_custom_call.1} parent=1 // pred_region
      %144 = dma.done [#allocation9], 1024
    $region89: #{tpu_custom_call.1} parent=1 // pred_fallthru
      _
    // Predicated region
    $region90: #{tpu_custom_call.1} parent=1 // pred_check
      _
    $region91: #{tpu_custom_call.1} parent=1 // pred_check_branch
      %146 = sbr.rel (0) target = $region93
    $region92: #{tpu_custom_call.1} parent=1 // pred_region
      %148 = dma.done [#allocation12], 1024
    $region93: #{tpu_custom_call.1} parent=1 // pred_fallthru
      _
    %v149 = vld [vmem:[#allocation2] sm:$0xff]
    %v150 = vpack.c.bf16 %v149, %v149
    %v151 = vld [vmem:[#allocation5] sm:$0xf]
    %v152 = vld [vmem:[#allocation5 + $0x4] sm:$0xf]
    %v153 = vld [vmem:[#allocation5 + $0x8] sm:$0xf]
    %v154 = vld [vmem:[#allocation5 + $0xc] sm:$0xf]
    %v155 = vld [vmem:[#allocation5 + $0x10] sm:$0xf]
    %v156 = vld [vmem:[#allocation5 + $0x14] sm:$0xf]
    %v157 = vld [vmem:[#allocation5 + $0x18] sm:$0xf]
    %v158 = vld [vmem:[#allocation5 + $0x1c] sm:$0xf]
    %v159 = vld [vmem:[#allocation5 + $0x20] sm:$0xf]
    %v160 = vld [vmem:[#allocation5 + $0x24] sm:$0xf]
    %v161 = vld [vmem:[#allocation5 + $0x28] sm:$0xf]
    %v162 = vld [vmem:[#allocation5 + $0x2c] sm:$0xf]
    %v163 = vld [vmem:[#allocation5 + $0x30] sm:$0xf]
    %v164 = vld [vmem:[#allocation5 + $0x34] sm:$0xf]
    %v165 = vld [vmem:[#allocation5 + $0x38] sm:$0xf]
    %v166 = vld [vmem:[#allocation5 + $0x3c] sm:$0xf]
    %v167 = vld [vmem:[%s2] sm:$0x1]
    %v169 = vperm.slane %v167, 0
    %v187 = vunpack.c.l.b16 %v151
    %v188 = vunpack.c.l.b16 %v152
    %v189 = vunpack.c.l.b16 %v153
    %v190 = vunpack.c.l.b16 %v154
    %v191 = vunpack.c.l.b16 %v155
    %v192 = vunpack.c.l.b16 %v156
    %v193 = vunpack.c.l.b16 %v157
    %v194 = vunpack.c.l.b16 %v158
    %v195 = vunpack.c.l.b16 %v159
    %v196 = vunpack.c.l.b16 %v160
    %v197 = vunpack.c.l.b16 %v161
    %v198 = vunpack.c.l.b16 %v162
    %v199 = vunpack.c.l.b16 %v163
    %v200 = vunpack.c.l.b16 %v164
    %v201 = vunpack.c.l.b16 %v165
    %v202 = vunpack.c.l.b16 %v166
    %v203 = vpack.c.b16 %v188, %v187
    %v204 = vpack.c.b16 %v190, %v189
    %v205 = vpack.c.b16 %v192, %v191
    %v206 = vpack.c.b16 %v194, %v193
    %v207 = vpack.c.b16 %v196, %v195
    %v208 = vpack.c.b16 %v198, %v197
    %v209 = vpack.c.b16 %v200, %v199
    %v210 = vpack.c.b16 %v202, %v201
    %219 = vmatpush.bf16.msra.mxu0 %v210
    %220 = vmatpush.bf16.msra.mxu0 %v209
    %221 = vmatpush.bf16.msra.mxu0 %v208
    %222 = vmatpush.bf16.msra.mxu0 %v207
    %223 = vmatpush.bf16.msra.mxu0 %v206
    %224 = vmatpush.bf16.msra.mxu0 %v205
    %225 = vmatpush.bf16.msra.mxu0 %v204
    %226 = vmatpush.bf16.msra.mxu0 %v203
    %227 = vmatmul.bf16.gmra.mxu0 %v150
    %v228 = vpop.f32.mrf.mxu0
    %v229 = vadd.f32 %v169, %v228
    %v230 = vpop.f32.mrf.mxu0
    %231 = vdwg.mxu0
    %v232 = vmax.f32 %v229, 0.0
    %v233 = vpack.c.bf16 %v232, %v232
    %v234 = vld [vmem:[#allocation7] sm:$0xf]
    %v235 = vld [vmem:[#allocation7 + $0x4] sm:$0xf]
    %v236 = vld [vmem:[#allocation7 + $0x8] sm:$0xf]
    %v237 = vld [vmem:[#allocation7 + $0xc] sm:$0xf]
    %v238 = vld [vmem:[#allocation7 + $0x10] sm:$0xf]
    %v239 = vld [vmem:[#allocation7 + $0x14] sm:$0xf]
    %v240 = vld [vmem:[#allocation7 + $0x18] sm:$0xf]
    %v241 = vld [vmem:[#allocation7 + $0x1c] sm:$0xf]
    %v242 = vld [vmem:[#allocation7 + $0x20] sm:$0xf]
    %v243 = vld [vmem:[#allocation7 + $0x24] sm:$0xf]
    %v244 = vld [vmem:[#allocation7 + $0x28] sm:$0xf]
    %v245 = vld [vmem:[#allocation7 + $0x2c] sm:$0xf]
    %v246 = vld [vmem:[#allocation7 + $0x30] sm:$0xf]
    %v247 = vld [vmem:[#allocation7 + $0x34] sm:$0xf]
    %v248 = vld [vmem:[#allocation7 + $0x38] sm:$0xf]
    %v249 = vld [vmem:[#allocation7 + $0x3c] sm:$0xf]
    %v250 = vld [vmem:[%s4] sm:$0x1]
    %v252 = vperm.slane %v250, 0
    %v270 = vunpack.c.l.b16 %v234
    %v271 = vunpack.c.l.b16 %v235
    %v272 = vunpack.c.l.b16 %v236
    %v273 = vunpack.c.l.b16 %v237
    %v274 = vunpack.c.l.b16 %v238
    %v275 = vunpack.c.l.b16 %v239
    %v276 = vunpack.c.l.b16 %v240
    %v277 = vunpack.c.l.b16 %v241
    %v278 = vunpack.c.l.b16 %v242
    %v279 = vunpack.c.l.b16 %v243
    %v280 = vunpack.c.l.b16 %v244
    %v281 = vunpack.c.l.b16 %v245
    %v282 = vunpack.c.l.b16 %v246
    %v283 = vunpack.c.l.b16 %v247
    %v284 = vunpack.c.l.b16 %v248
    %v285 = vunpack.c.l.b16 %v249
    %v286 = vpack.c.b16 %v271, %v270
    %v287 = vpack.c.b16 %v273, %v272
    %v288 = vpack.c.b16 %v275, %v274
    %v289 = vpack.c.b16 %v277, %v276
    %v290 = vpack.c.b16 %v279, %v278
    %v291 = vpack.c.b16 %v281, %v280
    %v292 = vpack.c.b16 %v283, %v282
    %v293 = vpack.c.b16 %v285, %v284
    %302 = vmatpush.bf16.msra.mxu0 %v293
    %303 = vmatpush.bf16.msra.mxu0 %v292
    %304 = vmatpush.bf16.msra.mxu0 %v291
    %305 = vmatpush.bf16.msra.mxu0 %v290
    %306 = vmatpush.bf16.msra.mxu0 %v289
    %307 = vmatpush.bf16.msra.mxu0 %v288
    %308 = vmatpush.bf16.msra.mxu0 %v287
    %309 = vmatpush.bf16.msra.mxu0 %v286
    %310 = vmatmul.bf16.gmra.mxu0 %v233
    %v311 = vpop.f32.mrf.mxu0
    %v312 = vadd.f32 %v252, %v311
    %v313 = vpop.f32.mrf.mxu0
    %314 = vdwg.mxu0
    %315 = vadd.xlane.f32.xlu0 %v312
    %v316 = vpop.xlane.xlu0 %315
    %v317 = vmul.f32 %v316, 0.03125
    %v318 = vsub.f32 %v312, %v317
    %v319 = vmul.f32 %v318, %v318
    %320 = vadd.xlane.f32.xlu0 %v319
    %v321 = vpop.xlane.xlu0 %320
    %v322 = vmul.f32 %v317, %v317
    %v323 = vmul.f32 %v322, 96.0
    %v324 = vsub.f32 %v321, %v323
    %v325 = vmul.f32 %v324, 0.03125
    %v326 = vadd.f32 %v325, 1e-05
    %v327 = vrsqrt.pop %v326
    %v328 = vmul.f32 %v327, %v326
    %v329 = vmul.f32 %v328, %v327
    %v330 = vmul.f32 0.5, %v329
    %v331 = vsub.f32 1.5, %v330
    %v332 = vmul.f32 %v327, %v331
    %vm333 = vweird.f32 %v326
    %vm334 = vweird.f32 %v327
    %vm335 = vmor %vm333, %vm334
    %v336 = vsel %vm335, %v327, %v332
    %v337 = vmul.f32 %v318, %v336
    %v338 = vld [vmem:[%s5] sm:$0x1]
    %v340 = vperm.slane %v338, 0
    %v342 = vmul.f32 %v337, %v340
    %v343 = vld [vmem:[%s6] sm:$0x1]
    %v345 = vperm.slane %v343, 0
    %v347 = vadd.f32 %v342, %v345
    %v348 = vmax.f32 %v347, 0.0
    %v349 = vpack.c.bf16 %v348, %v348
    %v350 = vld [vmem:[#allocation8] sm:$0xf]
    %v351 = vld [vmem:[#allocation8 + $0x4] sm:$0xf]
    %v352 = vld [vmem:[#allocation8 + $0x8] sm:$0xf]
    %v353 = vld [vmem:[#allocation8 + $0xc] sm:$0xf]
    %v354 = vld [vmem:[#allocation8 + $0x10] sm:$0xf]
    %v355 = vld [vmem:[#allocation8 + $0x14] sm:$0xf]
    %v356 = vld [vmem:[#allocation8 + $0x18] sm:$0xf]
    %v357 = vld [vmem:[#allocation8 + $0x1c] sm:$0xf]
    %v358 = vld [vmem:[#allocation8 + $0x20] sm:$0xf]
    %v359 = vld [vmem:[#allocation8 + $0x24] sm:$0xf]
    %v360 = vld [vmem:[#allocation8 + $0x28] sm:$0xf]
    %v361 = vld [vmem:[#allocation8 + $0x2c] sm:$0xf]
    %v362 = vld [vmem:[#allocation8 + $0x30] sm:$0xf]
    %v363 = vld [vmem:[#allocation8 + $0x34] sm:$0xf]
    %v364 = vld [vmem:[#allocation8 + $0x38] sm:$0xf]
    %v365 = vld [vmem:[#allocation8 + $0x3c] sm:$0xf]
    %v366 = vld [vmem:[%s8] sm:$0x1]
    %v368 = vperm.slane %v366, 0
    %v386 = vunpack.c.l.b16 %v350
    %v387 = vunpack.c.l.b16 %v351
    %v388 = vunpack.c.l.b16 %v352
    %v389 = vunpack.c.l.b16 %v353
    %v390 = vunpack.c.l.b16 %v354
    %v391 = vunpack.c.l.b16 %v355
    %v392 = vunpack.c.l.b16 %v356
    %v393 = vunpack.c.l.b16 %v357
    %v394 = vunpack.c.l.b16 %v358
    %v395 = vunpack.c.l.b16 %v359
    %v396 = vunpack.c.l.b16 %v360
    %v397 = vunpack.c.l.b16 %v361
    %v398 = vunpack.c.l.b16 %v362
    %v399 = vunpack.c.l.b16 %v363
    %v400 = vunpack.c.l.b16 %v364
    %v401 = vunpack.c.l.b16 %v365
    %v402 = vpack.c.b16 %v387, %v386
    %v403 = vpack.c.b16 %v389, %v388
    %v404 = vpack.c.b16 %v391, %v390
    %v405 = vpack.c.b16 %v393, %v392
    %v406 = vpack.c.b16 %v395, %v394
    %v407 = vpack.c.b16 %v397, %v396
    %v408 = vpack.c.b16 %v399, %v398
    %v409 = vpack.c.b16 %v401, %v400
    %418 = vmatpush.bf16.msra.mxu0 %v409
    %419 = vmatpush.bf16.msra.mxu0 %v408
    %420 = vmatpush.bf16.msra.mxu0 %v407
    %421 = vmatpush.bf16.msra.mxu0 %v406
    %422 = vmatpush.bf16.msra.mxu0 %v405
    %423 = vmatpush.bf16.msra.mxu0 %v404
    %424 = vmatpush.bf16.msra.mxu0 %v403
    %425 = vmatpush.bf16.msra.mxu0 %v402
    %426 = vmatmul.bf16.gmra.mxu0 %v349
    %v427 = vpop.f32.mrf.mxu0
    %v428 = vadd.f32 %v368, %v427
    %v429 = vpop.f32.mrf.mxu0
    %430 = vdwg.mxu0
    %431 = vadd.xlane.f32.xlu0 %v428
    %v432 = vpop.xlane.xlu0 %431
    %v433 = vmul.f32 %v432, 0.03125
    %v434 = vsub.f32 %v428, %v433
    %v435 = vmul.f32 %v434, %v434
    %436 = vadd.xlane.f32.xlu0 %v435
    %v437 = vpop.xlane.xlu0 %436
    %v438 = vmul.f32 %v433, %v433
    %v439 = vmul.f32 %v438, 96.0
    %v440 = vsub.f32 %v437, %v439
    %v441 = vmul.f32 %v440, 0.03125
    %v442 = vadd.f32 %v441, 1e-05
    %v443 = vrsqrt.pop %v442
    %v444 = vmul.f32 %v443, %v442
    %v445 = vmul.f32 %v444, %v443
    %v446 = vmul.f32 0.5, %v445
    %v447 = vsub.f32 1.5, %v446
    %v448 = vmul.f32 %v443, %v447
    %vm449 = vweird.f32 %v442
    %vm450 = vweird.f32 %v443
    %vm451 = vmor %vm449, %vm450
    %v452 = vsel %vm451, %v443, %v448
    %v453 = vmul.f32 %v434, %v452
    %v454 = vld [vmem:[%s9] sm:$0x1]
    %v456 = vperm.slane %v454, 0
    %v458 = vmul.f32 %v453, %v456
    %v459 = vld [vmem:[%s10] sm:$0x1]
    %v461 = vperm.slane %v459, 0
    %v463 = vadd.f32 %v458, %v461
    %v464 = vmax.f32 %v463, 0.0
    %v465 = vpack.c.bf16 %v464, %v464
    %v466 = vld [vmem:[#allocation10] sm:$0xf]
    %v467 = vld [vmem:[#allocation10 + $0x4] sm:$0xf]
    %v468 = vld [vmem:[#allocation10 + $0x8] sm:$0xf]
    %v469 = vld [vmem:[#allocation10 + $0xc] sm:$0xf]
    %v470 = vld [vmem:[#allocation10 + $0x10] sm:$0xf]
    %v471 = vld [vmem:[#allocation10 + $0x14] sm:$0xf]
    %v472 = vld [vmem:[#allocation10 + $0x18] sm:$0xf]
    %v473 = vld [vmem:[#allocation10 + $0x1c] sm:$0xf]
    %v474 = vld [vmem:[#allocation10 + $0x20] sm:$0xf]
    %v475 = vld [vmem:[#allocation10 + $0x24] sm:$0xf]
    %v476 = vld [vmem:[#allocation10 + $0x28] sm:$0xf]
    %v477 = vld [vmem:[#allocation10 + $0x2c] sm:$0xf]
    %v478 = vld [vmem:[#allocation10 + $0x30] sm:$0xf]
    %v479 = vld [vmem:[#allocation10 + $0x34] sm:$0xf]
    %v480 = vld [vmem:[#allocation10 + $0x38] sm:$0xf]
    %v481 = vld [vmem:[#allocation10 + $0x3c] sm:$0xf]
    %v482 = vld [vmem:[%s12] sm:$0x1]
    %v484 = vperm.slane %v482, 0
    %v502 = vunpack.c.l.b16 %v466
    %v503 = vunpack.c.l.b16 %v467
    %v504 = vunpack.c.l.b16 %v468
    %v505 = vunpack.c.l.b16 %v469
    %v506 = vunpack.c.l.b16 %v470
    %v507 = vunpack.c.l.b16 %v471
    %v508 = vunpack.c.l.b16 %v472
    %v509 = vunpack.c.l.b16 %v473
    %v510 = vunpack.c.l.b16 %v474
    %v511 = vunpack.c.l.b16 %v475
    %v512 = vunpack.c.l.b16 %v476
    %v513 = vunpack.c.l.b16 %v477
    %v514 = vunpack.c.l.b16 %v478
    %v515 = vunpack.c.l.b16 %v479
    %v516 = vunpack.c.l.b16 %v480
    %v517 = vunpack.c.l.b16 %v481
    %v518 = vpack.c.b16 %v503, %v502
    %v519 = vpack.c.b16 %v505, %v504
    %v520 = vpack.c.b16 %v507, %v506
    %v521 = vpack.c.b16 %v509, %v508
    %v522 = vpack.c.b16 %v511, %v510
    %v523 = vpack.c.b16 %v513, %v512
    %v524 = vpack.c.b16 %v515, %v514
    %v525 = vpack.c.b16 %v517, %v516
    %534 = vmatpush.bf16.msra.mxu0 %v525
    %535 = vmatpush.bf16.msra.mxu0 %v524
    %536 = vmatpush.bf16.msra.mxu0 %v523
    %537 = vmatpush.bf16.msra.mxu0 %v522
    %538 = vmatpush.bf16.msra.mxu0 %v521
    %539 = vmatpush.bf16.msra.mxu0 %v520
    %540 = vmatpush.bf16.msra.mxu0 %v519
    %541 = vmatpush.bf16.msra.mxu0 %v518
    %542 = vmatmul.bf16.gmra.mxu0 %v465
    %v543 = vpop.f32.mrf.mxu0
    %v544 = vadd.f32 %v484, %v543
    %v545 = vpop.f32.mrf.mxu0
    %546 = vdwg.mxu0
    %547 = vadd.xlane.f32.xlu0 %v544
    %v548 = vpop.xlane.xlu0 %547
    %v549 = vmul.f32 %v548, 0.03125
    %v550 = vsub.f32 %v544, %v549
    %v551 = vmul.f32 %v550, %v550
    %552 = vadd.xlane.f32.xlu0 %v551
    %v553 = vpop.xlane.xlu0 %552
    %v554 = vmul.f32 %v549, %v549
    %v555 = vmul.f32 %v554, 96.0
    %v556 = vsub.f32 %v553, %v555
    %v557 = vmul.f32 %v556, 0.03125
    %v558 = vadd.f32 %v557, 1e-05
    %v559 = vrsqrt.pop %v558
    %v560 = vmul.f32 %v559, %v558
    %v561 = vmul.f32 %v560, %v559
    %v562 = vmul.f32 0.5, %v561
    %v563 = vsub.f32 1.5, %v562
    %v564 = vmul.f32 %v559, %v563
    %vm565 = vweird.f32 %v558
    %vm566 = vweird.f32 %v559
    %vm567 = vmor %vm565, %vm566
    %v568 = vsel %vm567, %v559, %v564
    %v569 = vmul.f32 %v550, %v568
    %v570 = vld [vmem:[%s13] sm:$0x1]
    %v572 = vperm.slane %v570, 0
    %v574 = vmul.f32 %v569, %v572
    %v575 = vld [vmem:[%s14] sm:$0x1]
    %v577 = vperm.slane %v575, 0
    %v579 = vadd.f32 %v574, %v577
    %v580 = vmax.f32 %v579, 0.0
    %v581 = vpack.c.bf16 %v580, %v580
    %v582 = vld [vmem:[#allocation11] sm:$0xf]
    %v583 = vld [vmem:[#allocation11 + $0x4] sm:$0xf]
    %v584 = vld [vmem:[#allocation11 + $0x8] sm:$0xf]
    %v585 = vld [vmem:[#allocation11 + $0xc] sm:$0xf]
    %v586 = vld [vmem:[#allocation11 + $0x10] sm:$0xf]
    %v587 = vld [vmem:[#allocation11 + $0x14] sm:$0xf]
    %v588 = vld [vmem:[#allocation11 + $0x18] sm:$0xf]
    %v589 = vld [vmem:[#allocation11 + $0x1c] sm:$0xf]
    %v590 = vld [vmem:[#allocation11 + $0x20] sm:$0xf]
    %v591 = vld [vmem:[#allocation11 + $0x24] sm:$0xf]
    %v592 = vld [vmem:[#allocation11 + $0x28] sm:$0xf]
    %v593 = vld [vmem:[#allocation11 + $0x2c] sm:$0xf]
    %v594 = vld [vmem:[#allocation11 + $0x30] sm:$0xf]
    %v595 = vld [vmem:[#allocation11 + $0x34] sm:$0xf]
    %v596 = vld [vmem:[#allocation11 + $0x38] sm:$0xf]
    %v597 = vld [vmem:[#allocation11 + $0x3c] sm:$0xf]
    %v598 = vld [vmem:[%s16] sm:$0x1]
    %v600 = vperm.slane %v598, 0
    %v618 = vunpack.c.l.b16 %v582
    %v619 = vunpack.c.l.b16 %v583
    %v620 = vunpack.c.l.b16 %v584
    %v621 = vunpack.c.l.b16 %v585
    %v622 = vunpack.c.l.b16 %v586
    %v623 = vunpack.c.l.b16 %v587
    %v624 = vunpack.c.l.b16 %v588
    %v625 = vunpack.c.l.b16 %v589
    %v626 = vunpack.c.l.b16 %v590
    %v627 = vunpack.c.l.b16 %v591
    %v628 = vunpack.c.l.b16 %v592
    %v629 = vunpack.c.l.b16 %v593
    %v630 = vunpack.c.l.b16 %v594
    %v631 = vunpack.c.l.b16 %v595
    %v632 = vunpack.c.l.b16 %v596
    %v633 = vunpack.c.l.b16 %v597
    %v634 = vpack.c.b16 %v619, %v618
    %v635 = vpack.c.b16 %v621, %v620
    %v636 = vpack.c.b16 %v623, %v622
    %v637 = vpack.c.b16 %v625, %v624
    %v638 = vpack.c.b16 %v627, %v626
    %v639 = vpack.c.b16 %v629, %v628
    %v640 = vpack.c.b16 %v631, %v630
    %v641 = vpack.c.b16 %v633, %v632
    %650 = vmatpush.bf16.msra.mxu0 %v641
    %651 = vmatpush.bf16.msra.mxu0 %v640
    %652 = vmatpush.bf16.msra.mxu0 %v639
    %653 = vmatpush.bf16.msra.mxu0 %v638
    %654 = vmatpush.bf16.msra.mxu0 %v637
    %655 = vmatpush.bf16.msra.mxu0 %v636
    %656 = vmatpush.bf16.msra.mxu0 %v635
    %657 = vmatpush.bf16.msra.mxu0 %v634
    %658 = vmatmul.bf16.gmra.mxu0 %v581
    %v659 = vpop.f32.mrf.mxu0
    %v660 = vadd.f32 %v600, %v659
    %v661 = vpop.f32.mrf.mxu0
    %662 = vdwg.mxu0
    %vm663 = vcmp.gt.f32.partialorder %v660, 0.0
    %v664 = vsel %vm663, 1, 0
    %v665 = vcvt.s32.f32 %v664
    %666 = vst [vmem:[#allocation13] sm:$0xff] %v665
    // Predicated region
    $region94: #{tpu_custom_call.1} parent=1 // pred_check
      _
    $region95: #{tpu_custom_call.1} parent=1 // pred_check_branch
      %668 = sbr.rel (0) target = $region97
    $region96: #{tpu_custom_call.1} parent=1 // pred_region
      %670 = vsyncadd [#allocation4], 0
      %s672 = sshll.u32 [#allocation13], 4
      %s673 = int_to_ptr.vmem [resolvable:$true] %s672
      %s674 = sshll.u32 %s17, 4
      %s675 = int_to_ptr.hbm [resolvable:$true] %s674
      %677 = dma.vmem_to_hbm [thread:$0]  %s673, 128, %s675, [#allocation4]
    $region97: #{tpu_custom_call.1} parent=1 // pred_fallthru
      _
    // Predicated region
    $region98: #{tpu_custom_call.1} parent=1 // pred_check
      _
    $region99: #{tpu_custom_call.1} parent=1 // pred_check_branch
      %679 = sbr.rel (0) target = $region101
    $region100: #{tpu_custom_call.1} parent=1 // pred_region
      %681 = dma.done [#allocation4], 128
    $region101: #{tpu_custom_call.1} parent=1 // pred_fallthru
      _
    %682 = vsyncpa [#allocation3], 1
    %683 = vsyncpa [#allocation6], 1
    %684 = vsyncpa [#allocation9], 1
    %685 = vsyncpa [#allocation12], 1
    %686 = vsyncpa [#allocation4], 1

// kernel: tpu_custom_call.1
$region0: #{tpu_custom_call.1}
  #allocation0 [shape = 'u32[]', space=smem, size = 0x4, offset = 0x4, fixed_abs, tag = 'smem constant byte address 0x4 - core index']
  #allocation1 [shape = 'u32[72,128]{1,0:T(1,128)}', space=vmem, size = 0x9000, scoped, tag = 'internal scratch']
  %s0 = inlined_call_operand.hbm [shape: f32[8,128], index: 0, kind: input, shape index: {}]
  %s1 = inlined_call_operand.hbm [shape: bf16[128,128], index: 1, kind: input, shape index: {}]
  %s2 = inlined_call_operand.vmem [shape: f32[1,128], index: 2, kind: input, shape index: {}]
  %s3 = inlined_call_operand.hbm [shape: bf16[128,128], index: 3, kind: input, shape index: {}]
  %s4 = inlined_call_operand.vmem [shape: f32[1,128], index: 4, kind: input, shape index: {}]
  %s5 = inlined_call_operand.vmem [shape: f32[1,128], index: 5, kind: input, shape index: {}]
  %s6 = inlined_call_operand.vmem [shape: f32[1,128], index: 6, kind: input, shape index: {}]
  %s7 = inlined_call_operand.hbm [shape: bf16[128,128], index: 7, kind: input, shape index: {}]
  %s8 = inlined_call_operand.vmem [shape: f32[1,128], index: 8, kind: input, shape index: {}]
  %s9 = inlined_call_operand.vmem [shape: f32[1,128], index: 9, kind: input, shape index: {}]
  %s10 = inlined_call_operand.vmem [shape: f32[1,128], index: 10, kind: input, shape index: {}]
  %s11 = inlined_call_operand.hbm [shape: bf16[128,128], index: 11, kind: input, shape index: {}]
  %s12 = inlined_call_operand.vmem [shape: f32[1,128], index: 12, kind: input, shape index: {}]
  %s13 = inlined_call_operand.vmem [shape: f32[1,128], index: 13, kind: input, shape index: {}]
  %s14 = inlined_call_operand.vmem [shape: f32[1,128], index: 14, kind: input, shape index: {}]
  %s15 = inlined_call_operand.hbm [shape: bf16[128,128], index: 15, kind: input, shape index: {}]
  %s16 = inlined_call_operand.vmem [shape: f32[1,128], index: 16, kind: input, shape index: {}]
  %s17 = inlined_call_operand.hbm [shape: f32[8,128], index: 17, kind: output, shape index: {}]
  %s18 = sld [smem:[#allocation0]]
  $region102: #{tpu_custom_call.1} parent=0
    _
  %s20 = ssub.s32 1, %s18
  %s21 = scalar_select 0, %s20, %s18
  $region1: #{tpu_custom_call.1} parent=0
    #allocation2 [shape = 'u8[4096]{0}', space=vmem, size = 0x1000, scoped, tag = 'input window, operand 0, single buffered']
    #allocation3 [shape = 's32[1]{0}', space=sflag, size = 0x4, scoped, tag = 'scoped memory for tpu_custom_call.1']
    #allocation4 [shape = 's32[1]{0}', space=sflag, size = 0x4, scoped, tag = 'scoped memory for tpu_custom_call.1']
    #allocation5 [shape = 'u8[32768]{0}', space=vmem, size = 0x8000, scoped, tag = 'input window, operand 1, single buffered']
    #allocation6 [shape = 's32[1]{0}', space=sflag, size = 0x4, scoped, tag = 'scoped memory for tpu_custom_call.1']
    #allocation7 [shape = 'u8[32768]{0}', space=vmem, size = 0x8000, scoped, tag = 'input window, operand 3, single buffered']
    #allocation8 [shape = 'u8[32768]{0}', space=vmem, size = 0x8000, scoped, tag = 'input window, operand 7, single buffered']
    #allocation9 [shape = 's32[1]{0}', space=sflag, size = 0x4, scoped, tag = 'scoped memory for tpu_custom_call.1']
    #allocation10 [shape = 'u8[32768]{0}', space=vmem, size = 0x8000, scoped, tag = 'input window, operand 11, single buffered']
    #allocation11 [shape = 'u8[32768]{0}', space=vmem, size = 0x8000, scoped, tag = 'input window, operand 15, single buffered']
    #allocation12 [shape = 's32[1]{0}', space=sflag, size = 0x4, scoped, tag = 'scoped memory for tpu_custom_call.1']
    #allocation13 [shape = 'u8[4096]{0}', space=vmem, size = 0x1000, scoped, tag = 'output window, operand 0, single buffered']
    %22 = vsyncpa [#allocation3], 0
    %23 = vsyncpa [#allocation6], 0
    %24 = vsyncpa [#allocation9], 0
    %25 = vsyncpa [#allocation12], 0
    %26 = vsyncpa [#allocation4], 0
    // Predicated region
    $region2: #{tpu_custom_call.1} parent=1 // pred_check
      _
    $region3: #{tpu_custom_call.1} parent=1 // pred_check_branch
      %28 = sbr.rel (0) target = $region5
    $region4: #{tpu_custom_call.1} parent=1 // pred_region
      %30 = vsyncadd [#allocation3], 0
      %s32 = sshll.u32 %s0, 4
      %s33 = int_to_ptr.hbm [resolvable:$true] %s32
      %s34 = sshll.u32 [#allocation2], 4
      %s35 = int_to_ptr.vmem [resolvable:$true] %s34
      %37 = dma.hbm_to_vmem [thread:$0]  %s33, 128, %s35, [#allocation3]
    $region5: #{tpu_custom_call.1} parent=1 // pred_fallthru
      _
    // Predicated region
    $region6: #{tpu_custom_call.1} parent=1 // pred_check
      _
    $region7: #{tpu_custom_call.1} parent=1 // pred_check_branch
      %39 = sbr.rel (0) target = $region9
    $region8: #{tpu_custom_call.1} parent=1 // pred_region
      %41 = vsyncadd [#allocation6], 0
      %s42 = sshll.u32 %s1, 4
      %s43 = int_to_ptr.hbm [resolvable:$true] %s42
      %s44 = sshll.u32 [#allocation5], 4
      %s45 = int_to_ptr.vmem [resolvable:$true] %s44
      %50 = dma.hbm_to_vmem [thread:$0]  %s43, 1024, %s45, [#allocation6], 64, 64, 4
    $region9: #{tpu_custom_call.1} parent=1 // pred_fallthru
      _
    // Predicated region
    $region10: #{tpu_custom_call.1} parent=1 // pred_check
      _
    $region11: #{tpu_custom_call.1} parent=1 // pred_check_branch
      %52 = sbr.rel (0) target = $region13
    $region12: #{tpu_custom_call.1} parent=1 // pred_region
      _
    $region13: #{tpu_custom_call.1} parent=1 // pred_fallthru
      _
    // Predicated region
    $region14: #{tpu_custom_call.1} parent=1 // pred_check
      _
    $region15: #{tpu_custom_call.1} parent=1 // pred_check_branch
      %54 = sbr.rel (0) target = $region17
    $region16: #{tpu_custom_call.1} parent=1 // pred_region
      %56 = vsyncadd [#allocation6], 0
      %s57 = sshll.u32 %s3, 4
      %s58 = int_to_ptr.hbm [resolvable:$true] %s57
      %s59 = sshll.u32 [#allocation7], 4
      %s60 = int_to_ptr.vmem [resolvable:$true] %s59
      %65 = dma.hbm_to_vmem [thread:$0]  %s58, 1024, %s60, [#allocation6], 64, 64, 4
    $region17: #{tpu_custom_call.1} parent=1 // pred_fallthru
      _
    // Predicated region
    $region18: #{tpu_custom_call.1} parent=1 // pred_check
      _
    $region19: #{tpu_custom_call.1} parent=1 // pred_check_branch
      %67 = sbr.rel (0) target = $region21
    $region20: #{tpu_custom_call.1} parent=1 // pred_region
      _
    $region21: #{tpu_custom_call.1} parent=1 // pred_fallthru
      _
    // Predicated region
    $region22: #{tpu_custom_call.1} parent=1 // pred_check
      _
    $region23: #{tpu_custom_call.1} parent=1 // pred_check_branch
      %69 = sbr.rel (0) target = $region25
    $region24: #{tpu_custom_call.1} parent=1 // pred_region
      _
    $region25: #{tpu_custom_call.1} parent=1 // pred_fallthru
      _
    // Predicated region
    $region26: #{tpu_custom_call.1} parent=1 // pred_check
      _
    $region27: #{tpu_custom_call.1} parent=1 // pred_check_branch
      %71 = sbr.rel (0) target = $region29
    $region28: #{tpu_custom_call.1} parent=1 // pred_region
      _
    $region29: #{tpu_custom_call.1} parent=1 // pred_fallthru
      _
    // Predicated region
    $region30: #{tpu_custom_call.1} parent=1 // pred_check
      _
    $region31: #{tpu_custom_call.1} parent=1 // pred_check_branch
      %73 = sbr.rel (0) target = $region33
    $region32: #{tpu_custom_call.1} parent=1 // pred_region
      %75 = vsyncadd [#allocation9], 0
      %s76 = sshll.u32 %s7, 4
      %s77 = int_to_ptr.hbm [resolvable:$true] %s76
      %s78 = sshll.u32 [#allocation8], 4
      %s79 = int_to_ptr.vmem [resolvable:$true] %s78
      %84 = dma.hbm_to_vmem [thread:$0]  %s77, 1024, %s79, [#allocation9], 64, 64, 4
    $region33: #{tpu_custom_call.1} parent=1 // pred_fallthru
      _
    // Predicated region
    $region34: #{tpu_custom_call.1} parent=1 // pred_check
      _
    $region35: #{tpu_custom_call.1} parent=1 // pred_check_branch
      %86 = sbr.rel (0) target = $region37
    $region36: #{tpu_custom_call.1} parent=1 // pred_region
      _
    $region37: #{tpu_custom_call.1} parent=1 // pred_fallthru
      _
    // Predicated region
    $region38: #{tpu_custom_call.1} parent=1 // pred_check
      _
    $region39: #{tpu_custom_call.1} parent=1 // pred_check_branch
      %88 = sbr.rel (0) target = $region41
    $region40: #{tpu_custom_call.1} parent=1 // pred_region
      _
    $region41: #{tpu_custom_call.1} parent=1 // pred_fallthru
      _
    // Predicated region
    $region42: #{tpu_custom_call.1} parent=1 // pred_check
      _
    $region43: #{tpu_custom_call.1} parent=1 // pred_check_branch
      %90 = sbr.rel (0) target = $region45
    $region44: #{tpu_custom_call.1} parent=1 // pred_region
      _
    $region45: #{tpu_custom_call.1} parent=1 // pred_fallthru
      _
    // Predicated region
    $region46: #{tpu_custom_call.1} parent=1 // pred_check
      _
    $region47: #{tpu_custom_call.1} parent=1 // pred_check_branch
      %92 = sbr.rel (0) target = $region49
    $region48: #{tpu_custom_call.1} parent=1 // pred_region
      %94 = vsyncadd [#allocation9], 0
      %s95 = sshll.u32 %s11, 4
      %s96 = int_to_ptr.hbm [resolvable:$true] %s95
      %s97 = sshll.u32 [#allocation10], 4
      %s98 = int_to_ptr.vmem [resolvable:$true] %s97
      %103 = dma.hbm_to_vmem [thread:$0]  %s96, 1024, %s98, [#allocation9], 64, 64, 4
    $region49: #{tpu_custom_call.1} parent=1 // pred_fallthru
      _
    // Predicated region
    $region50: #{tpu_custom_call.1} parent=1 // pred_check
      _
    $region51: #{tpu_custom_call.1} parent=1 // pred_check_branch
      %105 = sbr.rel (0) target = $region53
    $region52: #{tpu_custom_call.1} parent=1 // pred_region
      _
    $region53: #{tpu_custom_call.1} parent=1 // pred_fallthru
      _
    // Predicated region
    $region54: #{tpu_custom_call.1} parent=1 // pred_check
      _
    $region55: #{tpu_custom_call.1} parent=1 // pred_check_branch
      %107 = sbr.rel (0) target = $region57
    $region56: #{tpu_custom_call.1} parent=1 // pred_region
      _
    $region57: #{tpu_custom_call.1} parent=1 // pred_fallthru
      _
    // Predicated region
    $region58: #{tpu_custom_call.1} parent=1 // pred_check
      _
    $region59: #{tpu_custom_call.1} parent=1 // pred_check_branch
      %109 = sbr.rel (0) target = $region61
    $region60: #{tpu_custom_call.1} parent=1 // pred_region
      _
    $region61: #{tpu_custom_call.1} parent=1 // pred_fallthru
      _
    // Predicated region
    $region62: #{tpu_custom_call.1} parent=1 // pred_check
      _
    $region63: #{tpu_custom_call.1} parent=1 // pred_check_branch
      %111 = sbr.rel (0) target = $region65
    $region64: #{tpu_custom_call.1} parent=1 // pred_region
      %113 = vsyncadd [#allocation12], 0
      %s114 = sshll.u32 %s15, 4
      %s115 = int_to_ptr.hbm [resolvable:$true] %s114
      %s116 = sshll.u32 [#allocation11], 4
      %s117 = int_to_ptr.vmem [resolvable:$true] %s116
      %122 = dma.hbm_to_vmem [thread:$0]  %s115, 1024, %s117, [#allocation12], 64, 64, 4
    $region65: #{tpu_custom_call.1} parent=1 // pred_fallthru
      _
    // Predicated region
    $region66: #{tpu_custom_call.1} parent=1 // pred_check
      _
    $region67: #{tpu_custom_call.1} parent=1 // pred_check_branch
      %124 = sbr.rel (0) target = $region69
    $region68: #{tpu_custom_call.1} parent=1 // pred_region
      _
    $region69: #{tpu_custom_call.1} parent=1 // pred_fallthru
      _
    // Predicated region
    $region70: #{tpu_custom_call.1} parent=1 // pred_check
      _
    $region71: #{tpu_custom_call.1} parent=1 // pred_check_branch
      %126 = sbr.rel (0) target = $region73
    $region72: #{tpu_custom_call.1} parent=1 // pred_region
      %128 = dma.done [#allocation3], 128
    $region73: #{tpu_custom_call.1} parent=1 // pred_fallthru
      _
    // Predicated region
    $region74: #{tpu_custom_call.1} parent=1 // pred_check
      _
    $region75: #{tpu_custom_call.1} parent=1 // pred_check_branch
      %130 = sbr.rel (0) target = $region77
    $region76: #{tpu_custom_call.1} parent=1 // pred_region
      %132 = dma.done [#allocation6], 1024
    $region77: #{tpu_custom_call.1} parent=1 // pred_fallthru
      _
    // Predicated region
    $region78: #{tpu_custom_call.1} parent=1 // pred_check
      _
    $region79: #{tpu_custom_call.1} parent=1 // pred_check_branch
      %134 = sbr.rel (0) target = $region81
    $region80: #{tpu_custom_call.1} parent=1 // pred_region
      %136 = dma.done [#allocation6], 1024
    $region81: #{tpu_custom_call.1} parent=1 // pred_fallthru
      _
    // Predicated region
    $region82: #{tpu_custom_call.1} parent=1 // pred_check
      _
    $region83: #{tpu_custom_call.1} parent=1 // pred_check_branch
      %138 = sbr.rel (0) target = $region85
    $region84: #{tpu_custom_call.1} parent=1 // pred_region
      %140 = dma.done [#allocation9], 1024
    $region85: #{tpu_custom_call.1} parent=1 // pred_fallthru
      _
    // Predicated region
    $region86: #{tpu_custom_call.1} parent=1 // pred_check
      _
    $region87: #{tpu_custom_call.1} parent=1 // pred_check_branch
      %142 = sbr.rel (0) target = $region89
    $region88: #{tpu_custom_call.1} parent=1 // pred_region
      %144 = dma.done [#allocation9], 1024
    $region89: #{tpu_custom_call.1} parent=1 // pred_fallthru
      _
    // Predicated region
    $region90: #{tpu_custom_call.1} parent=1 // pred_check
      _
    $region91: #{tpu_custom_call.1} parent=1 // pred_check_branch
      %146 = sbr.rel (0) target = $region93
    $region92: #{tpu_custom_call.1} parent=1 // pred_region
      %148 = dma.done [#allocation12], 1024
    $region93: #{tpu_custom_call.1} parent=1 // pred_fallthru
      _
    %v149 = vld [vmem:[#allocation2] sm:$0xff]
    %v150 = vpack.c.bf16 %v149, %v149
    %v151 = vld [vmem:[#allocation5] sm:$0xf]
    %v152 = vld [vmem:[#allocation5 + $0x4] sm:$0xf]
    %v153 = vld [vmem:[#allocation5 + $0x8] sm:$0xf]
    %v154 = vld [vmem:[#allocation5 + $0xc] sm:$0xf]
    %v155 = vld [vmem:[#allocation5 + $0x10] sm:$0xf]
    %v156 = vld [vmem:[#allocation5 + $0x14] sm:$0xf]
    %v157 = vld [vmem:[#allocation5 + $0x18] sm:$0xf]
    %v158 = vld [vmem:[#allocation5 + $0x1c] sm:$0xf]
    %v159 = vld [vmem:[#allocation5 + $0x20] sm:$0xf]
    %v160 = vld [vmem:[#allocation5 + $0x24] sm:$0xf]
    %v161 = vld [vmem:[#allocation5 + $0x28] sm:$0xf]
    %v162 = vld [vmem:[#allocation5 + $0x2c] sm:$0xf]
    %v163 = vld [vmem:[#allocation5 + $0x30] sm:$0xf]
    %v164 = vld [vmem:[#allocation5 + $0x34] sm:$0xf]
    %v165 = vld [vmem:[#allocation5 + $0x38] sm:$0xf]
    %v166 = vld [vmem:[#allocation5 + $0x3c] sm:$0xf]
    %v167 = vld [vmem:[%s2] sm:$0x1]
    %v169 = vperm.slane %v167, 0
    %v187 = vunpack.c.l.b16 %v151
    %v188 = vunpack.c.l.b16 %v152
    %v189 = vunpack.c.l.b16 %v153
    %v190 = vunpack.c.l.b16 %v154
    %v191 = vunpack.c.l.b16 %v155
    %v192 = vunpack.c.l.b16 %v156
    %v193 = vunpack.c.l.b16 %v157
    %v194 = vunpack.c.l.b16 %v158
    %v195 = vunpack.c.l.b16 %v159
    %v196 = vunpack.c.l.b16 %v160
    %v197 = vunpack.c.l.b16 %v161
    %v198 = vunpack.c.l.b16 %v162
    %v199 = vunpack.c.l.b16 %v163
    %v200 = vunpack.c.l.b16 %v164
    %v201 = vunpack.c.l.b16 %v165
    %v202 = vunpack.c.l.b16 %v166
    %v203 = vpack.c.b16 %v188, %v187
    %v204 = vpack.c.b16 %v190, %v189
    %v205 = vpack.c.b16 %v192, %v191
    %v206 = vpack.c.b16 %v194, %v193
    %v207 = vpack.c.b16 %v196, %v195
    %v208 = vpack.c.b16 %v198, %v197
    %v209 = vpack.c.b16 %v200, %v199
    %v210 = vpack.c.b16 %v202, %v201
    %219 = vmatpush.bf16.msra.mxu0 %v210
    %220 = vmatpush.bf16.msra.mxu0 %v209
    %221 = vmatpush.bf16.msra.mxu0 %v208
    %222 = vmatpush.bf16.msra.mxu0 %v207
    %223 = vmatpush.bf16.msra.mxu0 %v206
    %224 = vmatpush.bf16.msra.mxu0 %v205
    %225 = vmatpush.bf16.msra.mxu0 %v204
    %226 = vmatpush.bf16.msra.mxu0 %v203
    %227 = vmatmul.bf16.gmra.mxu0 %v150
    %v228 = vpop.f32.mrf.mxu0
    %v229 = vadd.f32 %v169, %v228
    %v230 = vpop.f32.mrf.mxu0
    %231 = vdwg.mxu0
    %v232 = vmax.f32 %v229, 0.0
    %v233 = vpack.c.bf16 %v232, %v232
    %v234 = vld [vmem:[#allocation7] sm:$0xf]
    %v235 = vld [vmem:[#allocation7 + $0x4] sm:$0xf]
    %v236 = vld [vmem:[#allocation7 + $0x8] sm:$0xf]
    %v237 = vld [vmem:[#allocation7 + $0xc] sm:$0xf]
    %v238 = vld [vmem:[#allocation7 + $0x10] sm:$0xf]
    %v239 = vld [vmem:[#allocation7 + $0x14] sm:$0xf]
    %v240 = vld [vmem:[#allocation7 + $0x18] sm:$0xf]
    %v241 = vld [vmem:[#allocation7 + $0x1c] sm:$0xf]
    %v242 = vld [vmem:[#allocation7 + $0x20] sm:$0xf]
    %v243 = vld [vmem:[#allocation7 + $0x24] sm:$0xf]
    %v244 = vld [vmem:[#allocation7 + $0x28] sm:$0xf]
    %v245 = vld [vmem:[#allocation7 + $0x2c] sm:$0xf]
    %v246 = vld [vmem:[#allocation7 + $0x30] sm:$0xf]
    %v247 = vld [vmem:[#allocation7 + $0x34] sm:$0xf]
    %v248 = vld [vmem:[#allocation7 + $0x38] sm:$0xf]
    %v249 = vld [vmem:[#allocation7 + $0x3c] sm:$0xf]
    %v250 = vld [vmem:[%s4] sm:$0x1]
    %v252 = vperm.slane %v250, 0
    %v270 = vunpack.c.l.b16 %v234
    %v271 = vunpack.c.l.b16 %v235
    %v272 = vunpack.c.l.b16 %v236
    %v273 = vunpack.c.l.b16 %v237
    %v274 = vunpack.c.l.b16 %v238
    %v275 = vunpack.c.l.b16 %v239
    %v276 = vunpack.c.l.b16 %v240
    %v277 = vunpack.c.l.b16 %v241
    %v278 = vunpack.c.l.b16 %v242
    %v279 = vunpack.c.l.b16 %v243
    %v280 = vunpack.c.l.b16 %v244
    %v281 = vunpack.c.l.b16 %v245
    %v282 = vunpack.c.l.b16 %v246
    %v283 = vunpack.c.l.b16 %v247
    %v284 = vunpack.c.l.b16 %v248
    %v285 = vunpack.c.l.b16 %v249
    %v286 = vpack.c.b16 %v271, %v270
    %v287 = vpack.c.b16 %v273, %v272
    %v288 = vpack.c.b16 %v275, %v274
    %v289 = vpack.c.b16 %v277, %v276
    %v290 = vpack.c.b16 %v279, %v278
    %v291 = vpack.c.b16 %v281, %v280
    %v292 = vpack.c.b16 %v283, %v282
    %v293 = vpack.c.b16 %v285, %v284
    %302 = vmatpush.bf16.msra.mxu0 %v293
    %303 = vmatpush.bf16.msra.mxu0 %v292
    %304 = vmatpush.bf16.msra.mxu0 %v291
    %305 = vmatpush.bf16.msra.mxu0 %v290
    %306 = vmatpush.bf16.msra.mxu0 %v289
    %307 = vmatpush.bf16.msra.mxu0 %v288
    %308 = vmatpush.bf16.msra.mxu0 %v287
    %309 = vmatpush.bf16.msra.mxu0 %v286
    %310 = vmatmul.bf16.gmra.mxu0 %v233
    %v311 = vpop.f32.mrf.mxu0
    %v312 = vadd.f32 %v252, %v311
    %v313 = vpop.f32.mrf.mxu0
    %314 = vdwg.mxu0
    %315 = vadd.xlane.f32.xlu0 %v312
    %v316 = vpop.xlane.xlu0 %315
    %v317 = vmul.f32 %v316, 0.03125
    %v318 = vsub.f32 %v312, %v317
    %v319 = vmul.f32 %v318, %v318
    %320 = vadd.xlane.f32.xlu0 %v319
    %v321 = vpop.xlane.xlu0 %320
    %v322 = vmul.f32 %v317, %v317
    %v323 = vmul.f32 %v322, 96.0
    %v324 = vsub.f32 %v321, %v323
    %v325 = vmul.f32 %v324, 0.03125
    %v326 = vadd.f32 %v325, 1e-05
    %v327 = vrsqrt.pop %v326
    %v328 = vmul.f32 %v327, %v326
    %v329 = vmul.f32 %v328, %v327
    %v330 = vmul.f32 0.5, %v329
    %v331 = vsub.f32 1.5, %v330
    %v332 = vmul.f32 %v327, %v331
    %vm333 = vweird.f32 %v326
    %vm334 = vweird.f32 %v327
    %vm335 = vmor %vm333, %vm334
    %v336 = vsel %vm335, %v327, %v332
    %v337 = vmul.f32 %v318, %v336
    %v338 = vld [vmem:[%s5] sm:$0x1]
    %v340 = vperm.slane %v338, 0
    %v342 = vmul.f32 %v337, %v340
    %v343 = vld [vmem:[%s6] sm:$0x1]
    %v345 = vperm.slane %v343, 0
    %v347 = vadd.f32 %v342, %v345
    %v348 = vmax.f32 %v347, 0.0
    %v349 = vpack.c.bf16 %v348, %v348
    %v350 = vld [vmem:[#allocation8] sm:$0xf]
    %v351 = vld [vmem:[#allocation8 + $0x4] sm:$0xf]
    %v352 = vld [vmem:[#allocation8 + $0x8] sm:$0xf]
    %v353 = vld [vmem:[#allocation8 + $0xc] sm:$0xf]
    %v354 = vld [vmem:[#allocation8 + $0x10] sm:$0xf]
    %v355 = vld [vmem:[#allocation8 + $0x14] sm:$0xf]
    %v356 = vld [vmem:[#allocation8 + $0x18] sm:$0xf]
    %v357 = vld [vmem:[#allocation8 + $0x1c] sm:$0xf]
    %v358 = vld [vmem:[#allocation8 + $0x20] sm:$0xf]
    %v359 = vld [vmem:[#allocation8 + $0x24] sm:$0xf]
    %v360 = vld [vmem:[#allocation8 + $0x28] sm:$0xf]
    %v361 = vld [vmem:[#allocation8 + $0x2c] sm:$0xf]
    %v362 = vld [vmem:[#allocation8 + $0x30] sm:$0xf]
    %v363 = vld [vmem:[#allocation8 + $0x34] sm:$0xf]
    %v364 = vld [vmem:[#allocation8 + $0x38] sm:$0xf]
    %v365 = vld [vmem:[#allocation8 + $0x3c] sm:$0xf]
    %v366 = vld [vmem:[%s8] sm:$0x1]
    %v368 = vperm.slane %v366, 0
    %v386 = vunpack.c.l.b16 %v350
    %v387 = vunpack.c.l.b16 %v351
    %v388 = vunpack.c.l.b16 %v352
    %v389 = vunpack.c.l.b16 %v353
    %v390 = vunpack.c.l.b16 %v354
    %v391 = vunpack.c.l.b16 %v355
    %v392 = vunpack.c.l.b16 %v356
    %v393 = vunpack.c.l.b16 %v357
    %v394 = vunpack.c.l.b16 %v358
    %v395 = vunpack.c.l.b16 %v359
    %v396 = vunpack.c.l.b16 %v360
    %v397 = vunpack.c.l.b16 %v361
    %v398 = vunpack.c.l.b16 %v362
    %v399 = vunpack.c.l.b16 %v363
    %v400 = vunpack.c.l.b16 %v364
    %v401 = vunpack.c.l.b16 %v365
    %v402 = vpack.c.b16 %v387, %v386
    %v403 = vpack.c.b16 %v389, %v388
    %v404 = vpack.c.b16 %v391, %v390
    %v405 = vpack.c.b16 %v393, %v392
    %v406 = vpack.c.b16 %v395, %v394
    %v407 = vpack.c.b16 %v397, %v396
    %v408 = vpack.c.b16 %v399, %v398
    %v409 = vpack.c.b16 %v401, %v400
    %418 = vmatpush.bf16.msra.mxu0 %v409
    %419 = vmatpush.bf16.msra.mxu0 %v408
    %420 = vmatpush.bf16.msra.mxu0 %v407
    %421 = vmatpush.bf16.msra.mxu0 %v406
    %422 = vmatpush.bf16.msra.mxu0 %v405
    %423 = vmatpush.bf16.msra.mxu0 %v404
    %424 = vmatpush.bf16.msra.mxu0 %v403
    %425 = vmatpush.bf16.msra.mxu0 %v402
    %426 = vmatmul.bf16.gmra.mxu0 %v349
    %v427 = vpop.f32.mrf.mxu0
    %v428 = vadd.f32 %v368, %v427
    %v429 = vpop.f32.mrf.mxu0
    %430 = vdwg.mxu0
    %431 = vadd.xlane.f32.xlu0 %v428
    %v432 = vpop.xlane.xlu0 %431
    %v433 = vmul.f32 %v432, 0.03125
    %v434 = vsub.f32 %v428, %v433
    %v435 = vmul.f32 %v434, %v434
    %436 = vadd.xlane.f32.xlu0 %v435
    %v437 = vpop.xlane.xlu0 %436
    %v438 = vmul.f32 %v433, %v433
    %v439 = vmul.f32 %v438, 96.0
    %v440 = vsub.f32 %v437, %v439
    %v441 = vmul.f32 %v440, 0.03125
    %v442 = vadd.f32 %v441, 1e-05
    %v443 = vrsqrt.pop %v442
    %v444 = vmul.f32 %v443, %v442
    %v445 = vmul.f32 %v444, %v443
    %v446 = vmul.f32 0.5, %v445
    %v447 = vsub.f32 1.5, %v446
    %v448 = vmul.f32 %v443, %v447
    %vm449 = vweird.f32 %v442
    %vm450 = vweird.f32 %v443
    %vm451 = vmor %vm449, %vm450
    %v452 = vsel %vm451, %v443, %v448
    %v453 = vmul.f32 %v434, %v452
    %v454 = vld [vmem:[%s9] sm:$0x1]
    %v456 = vperm.slane %v454, 0
    %v458 = vmul.f32 %v453, %v456
    %v459 = vld [vmem:[%s10] sm:$0x1]
    %v461 = vperm.slane %v459, 0
    %v463 = vadd.f32 %v458, %v461
    %v464 = vmax.f32 %v463, 0.0
    %v465 = vpack.c.bf16 %v464, %v464
    %v466 = vld [vmem:[#allocation10] sm:$0xf]
    %v467 = vld [vmem:[#allocation10 + $0x4] sm:$0xf]
    %v468 = vld [vmem:[#allocation10 + $0x8] sm:$0xf]
    %v469 = vld [vmem:[#allocation10 + $0xc] sm:$0xf]
    %v470 = vld [vmem:[#allocation10 + $0x10] sm:$0xf]
    %v471 = vld [vmem:[#allocation10 + $0x14] sm:$0xf]
    %v472 = vld [vmem:[#allocation10 + $0x18] sm:$0xf]
    %v473 = vld [vmem:[#allocation10 + $0x1c] sm:$0xf]
    %v474 = vld [vmem:[#allocation10 + $0x20] sm:$0xf]
    %v475 = vld [vmem:[#allocation10 + $0x24] sm:$0xf]
    %v476 = vld [vmem:[#allocation10 + $0x28] sm:$0xf]
    %v477 = vld [vmem:[#allocation10 + $0x2c] sm:$0xf]
    %v478 = vld [vmem:[#allocation10 + $0x30] sm:$0xf]
    %v479 = vld [vmem:[#allocation10 + $0x34] sm:$0xf]
    %v480 = vld [vmem:[#allocation10 + $0x38] sm:$0xf]
    %v481 = vld [vmem:[#allocation10 + $0x3c] sm:$0xf]
    %v482 = vld [vmem:[%s12] sm:$0x1]
    %v484 = vperm.slane %v482, 0
    %v502 = vunpack.c.l.b16 %v466
    %v503 = vunpack.c.l.b16 %v467
    %v504 = vunpack.c.l.b16 %v468
    %v505 = vunpack.c.l.b16 %v469
    %v506 = vunpack.c.l.b16 %v470
    %v507 = vunpack.c.l.b16 %v471
    %v508 = vunpack.c.l.b16 %v472
    %v509 = vunpack.c.l.b16 %v473
    %v510 = vunpack.c.l.b16 %v474
    %v511 = vunpack.c.l.b16 %v475
    %v512 = vunpack.c.l.b16 %v476
    %v513 = vunpack.c.l.b16 %v477
    %v514 = vunpack.c.l.b16 %v478
    %v515 = vunpack.c.l.b16 %v479
    %v516 = vunpack.c.l.b16 %v480
    %v517 = vunpack.c.l.b16 %v481
    %v518 = vpack.c.b16 %v503, %v502
    %v519 = vpack.c.b16 %v505, %v504
    %v520 = vpack.c.b16 %v507, %v506
    %v521 = vpack.c.b16 %v509, %v508
    %v522 = vpack.c.b16 %v511, %v510
    %v523 = vpack.c.b16 %v513, %v512
    %v524 = vpack.c.b16 %v515, %v514
    %v525 = vpack.c.b16 %v517, %v516
    %534 = vmatpush.bf16.msra.mxu0 %v525
    %535 = vmatpush.bf16.msra.mxu0 %v524
    %536 = vmatpush.bf16.msra.mxu0 %v523
    %537 = vmatpush.bf16.msra.mxu0 %v522
    %538 = vmatpush.bf16.msra.mxu0 %v521
    %539 = vmatpush.bf16.msra.mxu0 %v520
    %540 = vmatpush.bf16.msra.mxu0 %v519
    %541 = vmatpush.bf16.msra.mxu0 %v518
    %542 = vmatmul.bf16.gmra.mxu0 %v465
    %v543 = vpop.f32.mrf.mxu0
    %v544 = vadd.f32 %v484, %v543
    %v545 = vpop.f32.mrf.mxu0
    %546 = vdwg.mxu0
    %547 = vadd.xlane.f32.xlu0 %v544
    %v548 = vpop.xlane.xlu0 %547
    %v549 = vmul.f32 %v548, 0.03125
    %v550 = vsub.f32 %v544, %v549
    %v551 = vmul.f32 %v550, %v550
    %552 = vadd.xlane.f32.xlu0 %v551
    %v553 = vpop.xlane.xlu0 %552
    %v554 = vmul.f32 %v549, %v549
    %v555 = vmul.f32 %v554, 96.0
    %v556 = vsub.f32 %v553, %v555
    %v557 = vmul.f32 %v556, 0.03125
    %v558 = vadd.f32 %v557, 1e-05
    %v559 = vrsqrt.pop %v558
    %v560 = vmul.f32 %v559, %v558
    %v561 = vmul.f32 %v560, %v559
    %v562 = vmul.f32 0.5, %v561
    %v563 = vsub.f32 1.5, %v562
    %v564 = vmul.f32 %v559, %v563
    %vm565 = vweird.f32 %v558
    %vm566 = vweird.f32 %v559
    %vm567 = vmor %vm565, %vm566
    %v568 = vsel %vm567, %v559, %v564
    %v569 = vmul.f32 %v550, %v568
    %v570 = vld [vmem:[%s13] sm:$0x1]
    %v572 = vperm.slane %v570, 0
    %v574 = vmul.f32 %v569, %v572
    %v575 = vld [vmem:[%s14] sm:$0x1]
    %v577 = vperm.slane %v575, 0
    %v579 = vadd.f32 %v574, %v577
    %v580 = vmax.f32 %v579, 0.0
    %v581 = vpack.c.bf16 %v580, %v580
    %v582 = vld [vmem:[#allocation11] sm:$0xf]
    %v583 = vld [vmem:[#allocation11 + $0x4] sm:$0xf]
    %v584 = vld [vmem:[#allocation11 + $0x8] sm:$0xf]
    %v585 = vld [vmem:[#allocation11 + $0xc] sm:$0xf]
    %v586 = vld [vmem:[#allocation11 + $0x10] sm:$0xf]
    %v587 = vld [vmem:[#allocation11 + $0x14] sm:$0xf]
    %v588 = vld [vmem:[#allocation11 + $0x18] sm:$0xf]
    %v589 = vld [vmem:[#allocation11 + $0x1c] sm:$0xf]
    %v590 = vld [vmem:[#allocation11 + $0x20] sm:$0xf]
    %v591 = vld [vmem:[#allocation11 + $0x24] sm:$0xf]
    %v592 = vld [vmem:[#allocation11 + $0x28] sm:$0xf]
    %v593 = vld [vmem:[#allocation11 + $0x2c] sm:$0xf]
    %v594 = vld [vmem:[#allocation11 + $0x30] sm:$0xf]
    %v595 = vld [vmem:[#allocation11 + $0x34] sm:$0xf]
    %v596 = vld [vmem:[#allocation11 + $0x38] sm:$0xf]
    %v597 = vld [vmem:[#allocation11 + $0x3c] sm:$0xf]
    %v598 = vld [vmem:[%s16] sm:$0x1]
    %v600 = vperm.slane %v598, 0
    %v618 = vunpack.c.l.b16 %v582
    %v619 = vunpack.c.l.b16 %v583
    %v620 = vunpack.c.l.b16 %v584
    %v621 = vunpack.c.l.b16 %v585
    %v622 = vunpack.c.l.b16 %v586
    %v623 = vunpack.c.l.b16 %v587
    %v624 = vunpack.c.l.b16 %v588
    %v625 = vunpack.c.l.b16 %v589
    %v626 = vunpack.c.l.b16 %v590
    %v627 = vunpack.c.l.b16 %v591
    %v628 = vunpack.c.l.b16 %v592
    %v629 = vunpack.c.l.b16 %v593
    %v630 = vunpack.c.l.b16 %v594
    %v631 = vunpack.c.l.b16 %v595
    %v632 = vunpack.c.l.b16 %v596
    %v633 = vunpack.c.l.b16 %v597
    %v634 = vpack.c.b16 %v619, %v618
    %v635 = vpack.c.b16 %v621, %v620
    %v636 = vpack.c.b16 %v623, %v622
    %v637 = vpack.c.b16 %v625, %v624
    %v638 = vpack.c.b16 %v627, %v626
    %v639 = vpack.c.b16 %v629, %v628
    %v640 = vpack.c.b16 %v631, %v630
    %v641 = vpack.c.b16 %v633, %v632
    %650 = vmatpush.bf16.msra.mxu0 %v641
    %651 = vmatpush.bf16.msra.mxu0 %v640
    %652 = vmatpush.bf16.msra.mxu0 %v639
    %653 = vmatpush.bf16.msra.mxu0 %v638
    %654 = vmatpush.bf16.msra.mxu0 %v637
    %655 = vmatpush.bf16.msra.mxu0 %v636
    %656 = vmatpush.bf16.msra.mxu0 %v635
    %657 = vmatpush.bf16.msra.mxu0 %v634
    %658 = vmatmul.bf16.gmra.mxu0 %v581
    %v659 = vpop.f32.mrf.mxu0
    %v660 = vadd.f32 %v600, %v659
    %v661 = vpop.f32.mrf.mxu0
    %662 = vdwg.mxu0
    %vm663 = vcmp.gt.f32.partialorder %v660, 0.0
    %v664 = vsel %vm663, 1, 0
    %v665 = vcvt.s32.f32 %v664
    %666 = vst [vmem:[#allocation13] sm:$0xff] %v665
    // Predicated region
    $region94: #{tpu_custom_call.1} parent=1 // pred_check
      _
    $region95: #{tpu_custom_call.1} parent=1 // pred_check_branch
      %668 = sbr.rel (0) target = $region97
    $region96: #{tpu_custom_call.1} parent=1 // pred_region
      %670 = vsyncadd [#allocation4], 0
      %s672 = sshll.u32 [#allocation13], 4
      %s673 = int_to_ptr.vmem [resolvable:$true] %s672
      %s674 = sshll.u32 %s17, 4
      %s675 = int_to_ptr.hbm [resolvable:$true] %s674
      %677 = dma.vmem_to_hbm [thread:$0]  %s673, 128, %s675, [#allocation4]
    $region97: #{tpu_custom_call.1} parent=1 // pred_fallthru
      _
    // Predicated region
    $region98: #{tpu_custom_call.1} parent=1 // pred_check
      _
    $region99: #{tpu_custom_call.1} parent=1 // pred_check_branch
      %679 = sbr.rel (0) target = $region101
    $region100: #{tpu_custom_call.1} parent=1 // pred_region
      %681 = dma.done [#allocation4], 128
    $region101: #{tpu_custom_call.1} parent=1 // pred_fallthru
      _
    %682 = vsyncpa [#allocation3], 1
    %683 = vsyncpa [#allocation6], 1
    %684 = vsyncpa [#allocation9], 1
    %685 = vsyncpa [#allocation12], 1
    %686 = vsyncpa [#allocation4], 1

</llo_original>
